<compile_context>
chip_gen: v7x
topology: tpu7x:2x2x1
jax: 0.10.0
libtpu: 0.0.40
codegen_flags: <defaults>
</compile_context>

<pallas_src>
import functools

import jax
import jax.numpy as jnp
from jax.experimental import pallas as pl
from jax.experimental.pallas import tpu as pltpu

EPS = 1e-6
_NEG_PAD = -1e30          # elu(_NEG_PAD) + 1 == exp(_NEG_PAD) == 0 exactly
_DEN_W = 128              # lane width of the ksum (ones-matmul) accumulator


def _elu_plus_one(x):
    # elu(x, alpha=1) + 1 == where(x > 0, x + 1, exp(x))
    return jnp.where(x > 0, x + 1.0, jnp.exp(x))


def _pad_head_dim(H, d):
    """Smallest d' >= d with (H*d') % 128 == 0, if it costs <= 2x; else d."""
    for p in range(128):
        dp = d + p
        if (H * dp) % 128 == 0:
            return dp if dp <= 2 * d else d
    return d


def _vmem_limit_bytes():
    # Generation-aware VMEM cap (85% of physical, headroom for Mosaic scratch).
    cap = 64 * 1024 * 1024            # conservative fallback (safe on v7x)
    try:
        info = pltpu.get_tpu_info()
        cap = int(getattr(info, "vmem_capacity_bytes", cap)) or cap
    except Exception:
        pass
    return int(cap * 0.85)


def _make_kv_build_kernel(HDv, S_arr, block_s, matmul_dtype, need_row_mask):
    def kernel(mask_ref, k_ref, v_ref, kv_ref, accn_ref, accd_ref):
        s = pl.program_id(1)

        @pl.when(s == 0)
        def _init():
            accn_ref[...] = jnp.zeros_like(accn_ref)
            accd_ref[...] = jnp.zeros_like(accd_ref)

        kf = _elu_plus_one(k_ref[...].astype(jnp.float32))        # [bs, HD]
        v = v_ref[...].astype(jnp.float32)                         # [bs, HDv]
        if need_row_mask:
            # Only emitted when S does not divide into the chunk size: zero the
            # garbage rows of the last partial chunk (both operands, so no 0*NaN).
            base = s * block_s
            rk = jax.lax.broadcasted_iota(jnp.int32, kf.shape, 0) + base
            kf = jnp.where(rk < S_arr, kf, 0.0)
            rv = jax.lax.broadcasted_iota(jnp.int32, v.shape, 0) + base
            v = jnp.where(rv < S_arr, v, 0.0)

        kf_m = kf.astype(matmul_dtype)
        accn_ref[...] += jax.lax.dot_general(
            kf_m, v.astype(matmul_dtype),
            dimension_numbers=(((0,), (0,)), ((), ())),            # contract S
            preferred_element_type=jnp.float32)                    # [HD, HDv]
        ones = jnp.ones((block_s, _DEN_W), matmul_dtype)
        accd_ref[...] += jax.lax.dot_general(
            kf_m, ones,
            dimension_numbers=(((0,), (0,)), ((), ())),
            preferred_element_type=jnp.float32)                    # [HD, 128]

        @pl.when(s == pl.num_programs(1) - 1)
        def _finalize():
            m = mask_ref[...]                                      # [HD, HDv] 0/1
            # Every column of accd holds the same K.sum(s); fold to a column and
            # broadcast it across each head's Dv columns under the head mask.
            ks_col = jnp.max(accd_ref[...], axis=1, keepdims=True)  # [HD, 1]
            kv_ref[:, :HDv] = (accn_ref[...] * m).astype(kv_ref.dtype)
            kv_ref[:, HDv:] = (ks_col * m).astype(kv_ref.dtype)

    return kernel


def _make_attn_kernel(HDv, eps, matmul_dtype, use_newton):
    def kernel(q_ref, kv_ref, o_ref):
        qf = _elu_plus_one(q_ref[...].astype(jnp.float32))         # [TL, HD]
        nd = jax.lax.dot_general(
            qf.astype(matmul_dtype), kv_ref[...],
            dimension_numbers=(((1,), (0,)), ((), ())),
            preferred_element_type=jnp.float32)                    # [TL, 2*HDv]
        num = nd[:, :HDv]                       # numerator, lane-aligned split
        den = nd[:, HDv:] + eps                 # per-head normaliser (repeated)
        inv = pl.reciprocal(den, approx=True)   # EUP slot
        if use_newton:                          # only worth it on the f32 path
            inv = inv * (2.0 - den * inv)
        o_ref[...] = (num * inv).astype(o_ref.dtype)

    return kernel


@functools.partial(jax.jit, static_argnames=("matmul_dtype", "block_l", "block_s"))
def linear_attention(queries, keys, values, *, matmul_dtype=jnp.bfloat16,
                     block_l=None, block_s=None):
    """queries [N,L,H,D], keys [N,S,H,D], values [N,S,H,Dv] -> [N,L,H,Dv].

    matmul_dtype: operand dtype fed to the MXU (bf16 = v6e/v7x throughput path,
    f32 = accurate-vs-reference path).  Accumulation is always f32."""
    N, L, H, D = queries.shape
    _, S, _, Dv = values.shape

    # ---- lane-dense padding (exact: padded K maps to feat(K) == 0, padded Q
    # columns multiply zero rows of kv, padded V columns are sliced off). ----
    Dp = _pad_head_dim(H, D)
    Dvp = _pad_head_dim(H, Dv)
    S_arr = S if S % 8 == 0 else S + (8 - S % 8)     # sublane-align the S axis

    q = queries
    if Dp != D:
        q = jnp.pad(q, ((0, 0), (0, 0), (0, 0), (0, Dp - D)))
    k = keys
    if Dp != D or S_arr != S:
        k = jnp.pad(k, ((0, 0), (0, S_arr - S), (0, 0), (0, Dp - D)),
                    constant_values=_NEG_PAD)
    v = values
    if Dvp != Dv or S_arr != S:
        v = jnp.pad(v, ((0, 0), (0, S_arr - S), (0, 0), (0, Dvp - Dv)))

    HD, HDv = H * Dp, H * Dvp
    # Free (contiguous) reshapes -- no transposes, no extra HBM traffic.
    q2 = q.reshape(N, L, HD)
    k2 = k.reshape(N, S_arr, HD)
    v2 = v.reshape(N, S_arr, HDv)

    # Block-diagonal head mask, built host-side (constant under jit).
    row_head = jnp.arange(HD, dtype=jnp.int32) // Dp
    col_head = jnp.arange(HDv, dtype=jnp.int32) // Dvp
    head_mask = (row_head[:, None] == col_head[None, :]).astype(jnp.float32)

    vmem_limit = _vmem_limit_bytes()
    in_bytes = jnp.dtype(queries.dtype).itemsize
    md_bytes = jnp.dtype(matmul_dtype).itemsize

    # ---- S chunking for the KV build (streamed, double-buffered chunks). ----
    bs = 1024 if block_s is None else block_s
    bs = max(8, min(bs, S_arr))
    bs = (bs // 8) * 8
    num_s = pl.cdiv(S_arr, bs)
    need_row_mask = (S_arr % bs) != 0

    # ---- L tiling: as large as the VMEM budget allows (<= 2048 rows). ----
    if block_l is None:
        budget = vmem_limit // 2
        bl = min(L, 8)
        for cand in (2048, 1024, 512, 256, 128, 64, 32, 16, 8):
            c = min(cand, L)
            if c < L:
                c = max(8, (c // 8) * 8)
            need = (2 * c * HD * in_bytes            # Q tile, double buffered
                    + 2 * c * HDv * in_bytes         # O tile, double buffered
                    + 2 * HD * 2 * HDv * md_bytes    # kv slab, double buffered
                    + 4 * c * (HD + 2 * HDv) * 4)    # f32 temporaries w/ slack
            if need <= budget:
                bl = c
                break
    else:
        bl = min(block_l, L)
        if bl < L:
            bl = max(8, (bl // 8) * 8)
    num_l = pl.cdiv(L, bl)

    # ---- Kernel 1: build masked [kv_num | ksum] per batch entry. ----
    kv_build = _make_kv_build_kernel(HDv, S_arr, bs, matmul_dtype, need_row_mask)
    kv = pl.pallas_call(
        kv_build,
        out_shape=jax.ShapeDtypeStruct((N, HD, 2 * HDv), matmul_dtype),
        grid=(N, num_s),
        in_specs=[
            pl.BlockSpec((HD, HDv), lambda n, s: (0, 0)),                   # mask (resident)
            pl.BlockSpec((pl.Squeezed(), bs, HD), lambda n, s: (n, s, 0)),  # K chunks
            pl.BlockSpec((pl.Squeezed(), bs, HDv), lambda n, s: (n, s, 0)), # V chunks
        ],
        out_specs=pl.BlockSpec((pl.Squeezed(), HD, 2 * HDv),
                               lambda n, s: (n, 0, 0)),
        scratch_shapes=[pltpu.VMEM((HD, HDv), jnp.float32),
                        pltpu.VMEM((HD, _DEN_W), jnp.float32)],
        compiler_params=pltpu.CompilerParams(
            dimension_semantics=("parallel", "arbitrary"),
            vmem_limit_bytes=vmem_limit),
    )(head_mask, k2, v2)

    # ---- Kernel 2: L sweep (no carried state -> both axes parallel). ----
    use_newton = jnp.dtype(matmul_dtype) == jnp.dtype(jnp.float32)
    attn = _make_attn_kernel(HDv, EPS, matmul_dtype, use_newton)
    out2 = pl.pallas_call(
        attn,
        out_shape=jax.ShapeDtypeStruct((N, L, HDv), queries.dtype),
        grid=(N, num_l),
        in_specs=[
            pl.BlockSpec((pl.Squeezed(), bl, HD), lambda n, l: (n, l, 0)),
            pl.BlockSpec((pl.Squeezed(), HD, 2 * HDv),
                         lambda n, l: (n, 0, 0)),                # resident across l
        ],
        out_specs=pl.BlockSpec((pl.Squeezed(), bl, HDv), lambda n, l: (n, l, 0)),
        compiler_params=pltpu.CompilerParams(
            dimension_semantics=("parallel", "parallel"),
            vmem_limit_bytes=vmem_limit),
    )(q2, kv)

    out = out2.reshape(N, L, H, Dvp)
    if Dvp != Dv:
        out = out[..., :Dv]
    return out


def _reference(queries, keys, values, eps=EPS):
    # Pure-JAX reference mirroring the PyTorch forward exactly.
    Q = jax.nn.elu(queries) + 1.0
    K = jax.nn.elu(keys) + 1.0
    v_length = values.shape[1]
    V = values / v_length
    KV = jnp.einsum('nshd,nshv->nhdv', K, V)
    Z = 1.0 / (jnp.einsum('nlhd,nhd->nlh', Q, K.sum(axis=1)) + eps)
    return jnp.einsum('nlhd,nhdv,nlh->nlhv', Q, KV, Z) * v_length


if __name__ == "__main__":
    key = jax.random.PRNGKey(0)
    kq, kk, kvkey = jax.random.split(key, 3)

    N, L, S, H, D = 2, 16, 8, 2, 32
    queries = jax.random.normal(kq, (N, L, H, D), dtype=jnp.float32)
    keys = jax.random.normal(kk, (N, S, H, D), dtype=jnp.float32)
    values = jax.random.normal(kvkey, (N, S, H, D), dtype=jnp.float32)

    ref = _reference(queries, keys, values)

    # f32 MXU feed: accurate path.
    out_f32 = jax.block_until_ready(
        linear_attention(queries, keys, values, matmul_dtype=jnp.float32))
    assert out_f32.shape == (N, L, H, D)
    assert jnp.allclose(out_f32, ref, atol=2e-2, rtol=2e-2), "f32 path mismatch"

    # bf16 MXU feed (v6e/v7x throughput path): looser tolerance.
    out_bf16 = jax.block_until_ready(
        linear_attention(queries, keys, values, matmul_dtype=jnp.bfloat16))
    assert out_bf16.shape == (N, L, H, D)
    assert jnp.allclose(out_bf16, ref, atol=6e-2, rtol=6e-2), "bf16 path mismatch"

    print("KERNEL_OK")
</pallas_src>

<mosaic_0001>
module attributes {stable_mosaic.version = 11 : i64} {
  func.func @kernel(%arg0: i32, %arg1: i32, %arg2: memref<1x16x128xf32, #tpu.memory_space<vmem>>, %arg3: memref<1x128x256xf32, #tpu.memory_space<vmem>>, %arg4: memref<1x16x128xf32, #tpu.memory_space<vmem>>) attributes {dimension_semantics = [#tpu.dimension_semantics<parallel>, #tpu.dimension_semantics<parallel>], iteration_bounds = array<i64: 2, 1>, scalar_prefetch = 0 : i64, scratch_operands = 0 : i64, tpu.core_type = #tpu.core_type<tc>, window_params = [{transform_indices = @transform_0, window_bounds = array<i64: 1, 16, 128>}, {transform_indices = @transform_1, window_bounds = array<i64: 1, 128, 256>}, {transform_indices = @transform_2, window_bounds = array<i64: 1, 16, 128>}]} {
    %c0 = arith.constant 0 : index
    %c0_0 = arith.constant 0 : index
    %c0_1 = arith.constant 0 : index
    %0 = vector.load %arg2[%c0, %c0_0, %c0_1] : memref<1x16x128xf32, #tpu.memory_space<vmem>>, vector<1x16x128xf32>
    %1 = vector.shape_cast %0 : vector<1x16x128xf32> to vector<16x128xf32>
    %cst = arith.constant 0.000000e+00 : f32
    %2 = vector.broadcast %cst : f32 to vector<16x128xf32>
    %3 = arith.cmpf ogt, %1, %2 : vector<16x128xf32>
    %cst_2 = arith.constant 1.000000e+00 : f32
    %4 = vector.broadcast %cst_2 : f32 to vector<16x128xf32>
    %5 = arith.addf %1, %4 : vector<16x128xf32>
    %6 = math.exp %1 : vector<16x128xf32>
    %7 = arith.select %3, %5, %6 : vector<16x128xi1>, vector<16x128xf32>
    %c0_3 = arith.constant 0 : index
    %c0_4 = arith.constant 0 : index
    %c0_5 = arith.constant 0 : index
    %8 = vector.load %arg3[%c0_3, %c0_4, %c0_5] : memref<1x128x256xf32, #tpu.memory_space<vmem>>, vector<1x128x256xf32>
    %9 = vector.shape_cast %8 : vector<1x128x256xf32> to vector<128x256xf32>
    %cst_6 = arith.constant dense<0.000000e+00> : vector<16x256xf32>
    %10 = tpu.matmul %7, %9, %cst_6 {dimension_numbers = #tpu.dot_dimension_numbers<[1], [0], [0], [1], [0, 0, 1, 1], [], []>} : vector<16x128xf32>, vector<128x256xf32>, vector<16x256xf32> -> vector<16x256xf32>
    %11 = vector.extract_strided_slice %10 {offsets = [0, 0], sizes = [16, 128], strides = [1, 1]} : vector<16x256xf32> to vector<16x128xf32>
    %12 = vector.extract_strided_slice %10 {offsets = [0, 128], sizes = [16, 128], strides = [1, 1]} : vector<16x256xf32> to vector<16x128xf32>
    %cst_7 = arith.constant 9.99999997E-7 : f32
    %13 = vector.broadcast %cst_7 : f32 to vector<16x128xf32>
    %14 = arith.addf %12, %13 : vector<16x128xf32>
    %15 = tpu.reciprocal %14 {approx = true} : vector<16x128xf32> -> vector<16x128xf32>
    %16 = arith.mulf %14, %15 : vector<16x128xf32>
    %cst_8 = arith.constant 2.000000e+00 : f32
    %17 = vector.broadcast %cst_8 : f32 to vector<16x128xf32>
    %18 = arith.subf %17, %16 : vector<16x128xf32>
    %19 = arith.mulf %15, %18 : vector<16x128xf32>
    %20 = arith.mulf %11, %19 : vector<16x128xf32>
    %c0_9 = arith.constant 0 : index
    %c0_10 = arith.constant 0 : index
    %c0_11 = arith.constant 0 : index
    %21 = vector.load %arg4[%c0_9, %c0_10, %c0_11] : memref<1x16x128xf32, #tpu.memory_space<vmem>>, vector<1x16x128xf32>
    %22 = vector.shape_cast %21 : vector<1x16x128xf32> to vector<16x128xf32>
    %23 = vector.shape_cast %20 : vector<16x128xf32> to vector<1x16x128xf32>
    tpu.vector_store %arg4[%c0_9, %c0_10, %c0_11], %23 {strides = array<i32>} : memref<1x16x128xf32, #tpu.memory_space<vmem>>, vector<1x16x128xf32>,
    return
  }
  func.func @transform_0(%arg0: i32, %arg1: i32) -> (i32, i32, i32) {
    %c0_i32 = arith.constant 0 : i32
    %c0_i32_0 = arith.constant 0 : i32
    return %arg0, %arg1, %c0_i32 : i32, i32, i32
  }
  func.func @transform_1(%arg0: i32, %arg1: i32) -> (i32, i32, i32) {
    %c0_i32 = arith.constant 0 : i32
    %c0_i32_0 = arith.constant 0 : i32
    %c0_i32_1 = arith.constant 0 : i32
    return %arg0, %c0_i32, %c0_i32_0 : i32, i32, i32
  }
  func.func @transform_2(%arg0: i32, %arg1: i32) -> (i32, i32, i32) {
    %c0_i32 = arith.constant 0 : i32
    %c0_i32_0 = arith.constant 0 : i32
    return %arg0, %arg1, %c0_i32 : i32, i32, i32
  }
}

module attributes {stable_mosaic.version = 11 : i64} {
  func.func @kernel(%arg0: i32, %arg1: i32, %arg2: memref<128x128xf32, #tpu.memory_space<vmem>>, %arg3: memref<1x8x128xf32, #tpu.memory_space<vmem>>, %arg4: memref<1x8x128xf32, #tpu.memory_space<vmem>>, %arg5: memref<1x128x256xf32, #tpu.memory_space<vmem>>, %arg6: memref<128x128xf32, #tpu.memory_space<vmem>>, %arg7: memref<128x128xf32, #tpu.memory_space<vmem>>) attributes {dimension_semantics = [#tpu.dimension_semantics<parallel>, #tpu.dimension_semantics<arbitrary>], iteration_bounds = array<i64: 2, 1>, scalar_prefetch = 0 : i64, scratch_operands = 2 : i64, tpu.core_type = #tpu.core_type<tc>, window_params = [{pipeline_mode = #tpu.pipeline_mode<synchronous>, transform_indices = @transform_0, window_bounds = array<i64: 128, 128>}, {transform_indices = @transform_1, window_bounds = array<i64: 1, 8, 128>}, {transform_indices = @transform_2, window_bounds = array<i64: 1, 8, 128>}, {transform_indices = @transform_3, window_bounds = array<i64: 1, 128, 256>}]} {
    %c0_i32 = arith.constant 0 : i32
    %0 = arith.cmpi eq, %arg1, %c0_i32 : i32
    %1 = arith.extui %0 : i1 to i32
    %c0_i32_0 = arith.constant 0 : i32
    %2 = arith.cmpi ne, %1, %c0_i32_0 : i32
    scf.if %2 {
      %cst_20 = arith.constant 0.000000e+00 : f32
      %25 = vector.broadcast %cst_20 : f32 to vector<128x128xf32>
      %c0_21 = arith.constant 0 : index
      %c0_22 = arith.constant 0 : index
      %26 = vector.load %arg6[%c0_21, %c0_22] : memref<128x128xf32, #tpu.memory_space<vmem>>, vector<128x128xf32>
      tpu.vector_store %arg6[%c0_21, %c0_22], %25 {strides = array<i32>} : memref<128x128xf32, #tpu.memory_space<vmem>>, vector<128x128xf32>,
      %cst_23 = arith.constant 0.000000e+00 : f32
      %27 = vector.broadcast %cst_23 : f32 to vector<128x128xf32>
      %c0_24 = arith.constant 0 : index
      %c0_25 = arith.constant 0 : index
      %28 = vector.load %arg7[%c0_24, %c0_25] : memref<128x128xf32, #tpu.memory_space<vmem>>, vector<128x128xf32>
      tpu.vector_store %arg7[%c0_24, %c0_25], %27 {strides = array<i32>} : memref<128x128xf32, #tpu.memory_space<vmem>>, vector<128x128xf32>,
    } else {
    }
    %c0 = arith.constant 0 : index
    %c0_1 = arith.constant 0 : index
    %c0_2 = arith.constant 0 : index
    %3 = vector.load %arg3[%c0, %c0_1, %c0_2] : memref<1x8x128xf32, #tpu.memory_space<vmem>>, vector<1x8x128xf32>
    %4 = vector.shape_cast %3 : vector<1x8x128xf32> to vector<8x128xf32>
    %cst = arith.constant 0.000000e+00 : f32
    %5 = vector.broadcast %cst : f32 to vector<8x128xf32>
    %6 = arith.cmpf ogt, %4, %5 : vector<8x128xf32>
    %cst_3 = arith.constant 1.000000e+00 : f32
    %7 = vector.broadcast %cst_3 : f32 to vector<8x128xf32>
    %8 = arith.addf %4, %7 : vector<8x128xf32>
    %9 = math.exp %4 : vector<8x128xf32>
    %10 = arith.select %6, %8, %9 : vector<8x128xi1>, vector<8x128xf32>
    %c0_4 = arith.constant 0 : index
    %c0_5 = arith.constant 0 : index
    %c0_6 = arith.constant 0 : index
    %11 = vector.load %arg4[%c0_4, %c0_5, %c0_6] : memref<1x8x128xf32, #tpu.memory_space<vmem>>, vector<1x8x128xf32>
    %12 = vector.shape_cast %11 : vector<1x8x128xf32> to vector<8x128xf32>
    %c0_7 = arith.constant 0 : index
    %c0_8 = arith.constant 0 : index
    %13 = vector.load %arg6[%c0_7, %c0_8] : memref<128x128xf32, #tpu.memory_space<vmem>>, vector<128x128xf32>
    %cst_9 = arith.constant dense<0.000000e+00> : vector<128x128xf32>
    %14 = tpu.matmul %10, %12, %cst_9 {dimension_numbers = #tpu.dot_dimension_numbers<[0], [0], [1], [1], [0, 1, 1, 1], [], []>} : vector<8x128xf32>, vector<8x128xf32>, vector<128x128xf32> -> vector<128x128xf32>
    %15 = arith.addf %13, %14 : vector<128x128xf32>
    %c0_10 = arith.constant 0 : index
    %c0_11 = arith.constant 0 : index
    %16 = vector.load %arg6[%c0_10, %c0_11] : memref<128x128xf32, #tpu.memory_space<vmem>>, vector<128x128xf32>
    tpu.vector_store %arg6[%c0_10, %c0_11], %15 {strides = array<i32>} : memref<128x128xf32, #tpu.memory_space<vmem>>, vector<128x128xf32>,
    %cst_12 = arith.constant 1.000000e+00 : f32
    %17 = vector.broadcast %cst_12 : f32 to vector<8x128xf32>
    %c0_13 = arith.constant 0 : index
    %c0_14 = arith.constant 0 : index
    %18 = vector.load %arg7[%c0_13, %c0_14] : memref<128x128xf32, #tpu.memory_space<vmem>>, vector<128x128xf32>
    %cst_15 = arith.constant dense<0.000000e+00> : vector<128x128xf32>
    %19 = tpu.matmul %10, %17, %cst_15 {dimension_numbers = #tpu.dot_dimension_numbers<[0], [0], [1], [1], [0, 1, 1, 1], [], []>} : vector<8x128xf32>, vector<8x128xf32>, vector<128x128xf32> -> vector<128x128xf32>
    %20 = arith.addf %18, %19 : vector<128x128xf32>
    %c0_16 = arith.constant 0 : index
    %c0_17 = arith.constant 0 : index
    %21 = vector.load %arg7[%c0_16, %c0_17] : memref<128x128xf32, #tpu.memory_space<vmem>>, vector<128x128xf32>
    tpu.vector_store %arg7[%c0_16, %c0_17], %20 {strides = array<i32>} : memref<128x128xf32, #tpu.memory_space<vmem>>, vector<128x128xf32>,
    %c0_i32_18 = arith.constant 0 : i32
    %22 = arith.cmpi eq, %arg1, %c0_i32_18 : i32
    %23 = arith.extui %22 : i1 to i32
    %c0_i32_19 = arith.constant 0 : i32
    %24 = arith.cmpi ne, %23, %c0_i32_19 : i32
    scf.if %24 {
      %c0_20 = arith.constant 0 : index
      %c0_21 = arith.constant 0 : index
      %25 = vector.load %arg2[%c0_20, %c0_21] : memref<128x128xf32, #tpu.memory_space<vmem>>, vector<128x128xf32>
      %c0_22 = arith.constant 0 : index
      %c0_23 = arith.constant 0 : index
      %26 = vector.load %arg7[%c0_22, %c0_23] : memref<128x128xf32, #tpu.memory_space<vmem>>, vector<128x128xf32>
      %cst_24 = arith.constant dense<0xFF800000> : vector<128xf32>
      %27 = vector.multi_reduction <maximumf>, %26, %cst_24 [1] : vector<128x128xf32> to vector<128xf32>
      %28 = vector.shape_cast %27 : vector<128xf32> to vector<128x1xf32>
      %c0_25 = arith.constant 0 : index
      %c0_26 = arith.constant 0 : index
      %29 = vector.load %arg6[%c0_25, %c0_26] : memref<128x128xf32, #tpu.memory_space<vmem>>, vector<128x128xf32>
      %30 = arith.mulf %29, %25 : vector<128x128xf32>
      %c0_27 = arith.constant 0 : index
      %c0_28 = arith.constant 0 : index
      %c0_29 = arith.constant 0 : index
      %31 = vector.load %arg5[%c0_27, %c0_28, %c0_29] : memref<1x128x256xf32, #tpu.memory_space<vmem>>, vector<1x128x128xf32>
      %32 = vector.shape_cast %31 : vector<1x128x128xf32> to vector<128x128xf32>
      %33 = vector.shape_cast %30 : vector<128x128xf32> to vector<1x128x128xf32>
      tpu.vector_store %arg5[%c0_27, %c0_28, %c0_29], %33 {strides = array<i32>} : memref<1x128x256xf32, #tpu.memory_space<vmem>>, vector<1x128x128xf32>,
      %34 = vector.broadcast %28 : vector<128x1xf32> to vector<128x128xf32>
      %35 = arith.mulf %34, %25 : vector<128x128xf32>
      %c0_30 = arith.constant 0 : index
      %c0_31 = arith.constant 0 : index
      %c128 = arith.constant 128 : index
      %36 = vector.load %arg5[%c0_30, %c0_31, %c128] : memref<1x128x256xf32, #tpu.memory_space<vmem>>, vector<1x128x128xf32>
      %37 = vector.shape_cast %36 : vector<1x128x128xf32> to vector<128x128xf32>
      %38 = vector.shape_cast %35 : vector<128x128xf32> to vector<1x128x128xf32>
      tpu.vector_store %arg5[%c0_30, %c0_31, %c128], %38 {strides = array<i32>} : memref<1x128x256xf32, #tpu.memory_space<vmem>>, vector<1x128x128xf32>,
    } else {
    }
    return
  }
  func.func @transform_0(%arg0: i32, %arg1: i32) -> (i32, i32) {
    %c0_i32 = arith.constant 0 : i32
    %c0_i32_0 = arith.constant 0 : i32
    %c0_i32_1 = arith.constant 0 : i32
    return %c0_i32, %c0_i32_0 : i32, i32
  }
  func.func @transform_1(%arg0: i32, %arg1: i32) -> (i32, i32, i32) {
    %c0_i32 = arith.constant 0 : i32
    %c0_i32_0 = arith.constant 0 : i32
    return %arg0, %arg1, %c0_i32 : i32, i32, i32
  }
  func.func @transform_2(%arg0: i32, %arg1: i32) -> (i32, i32, i32) {
    %c0_i32 = arith.constant 0 : i32
    %c0_i32_0 = arith.constant 0 : i32
    return %arg0, %arg1, %c0_i32 : i32, i32, i32
  }
  func.func @transform_3(%arg0: i32, %arg1: i32) -> (i32, i32, i32) {
    %c0_i32 = arith.constant 0 : i32
    %c0_i32_0 = arith.constant 0 : i32
    %c0_i32_1 = arith.constant 0 : i32
    return %arg0, %c0_i32, %c0_i32_0 : i32, i32, i32
  }
}

</mosaic_0001>

<llo_original>
// kernel: linear_attention.3
$region0: #{linear_attention.3}
  #allocation0 [shape = 'u32[]', space=smem, size = 0x4, offset = 0x4, fixed_abs, tag = 'smem constant byte address 0x4 - core index']
  #allocation1 [shape = 'u32[144,128]{1,0:T(1,128)}', space=vmem, size = 0x12000, scoped, tag = 'internal scratch']
  %s0 = inlined_call_operand.vmem [shape: f32[2,16,128], index: 0, kind: input, shape index: {}]
  %s1 = inlined_call_operand.vmem [shape: f32[2,128,256], index: 1, kind: input, shape index: {}]
  %s2 = inlined_call_operand.vmem [shape: f32[2,16,128], index: 2, kind: output, shape index: {}]
  %s3 = sld [smem:[#allocation0]]
  $region41: #{linear_attention.3} parent=0
    _
  %s5 = ssub.s32 1, %s3
  %s6 = scalar_select 0, %s5, %s3
  loop: start=0, step=1, limit=4
  $region2: #{linear_attention.3} parent=0 // loop_pre_header
    _
  $region3: #{linear_attention.3} parent=0 // loop_header
    %s8 = sphi 0, %s12
    %p9 = scmp.ge.s32.totalorder %s8, 4
    %s15 = sphi 0, %s27
    %s16 = sphi 0, %s23
    %s17 = sphi 0, %s15
    %s18 = sphi 0, %s16
    %s19 = sphi 0, %s17
    %s20 = sphi 0, %s18
    %s32 = sphi 0, %s34
    %s35 = sphi 0, %s32
    %s36 = sphi 0, %s35
    %s52 = sphi 0, %s36
    %s58 = sphi 0, %s60
    %s61 = sphi 0, %s58
    %s62 = sphi 0, %s61
    %s78 = sphi 0, %s62
    %s86 = sphi 0, %s88
    %s89 = sphi 0, %s86
    %s90 = sphi 0, %s89
    %s106 = sphi 0, %s90
  $region4: #{linear_attention.3} parent=0 // loop_header_branch
    %11 = sbr.rel (%p9) target = $region8
  $region5: #{linear_attention.3} parent=0 // loop_body
    %s13 = ssub.s32 %s8, 1
    %s14 = ssub.s32 %s8, 2
    %s21 = sadd.s32 1, %s16
    %p22 = scmp.ge.s32.totalorder %s21, 1
    %s23 = scalar_select %p22, 0, %s21
    %s24 = sadd.s32 1, %s15
    %s25 = scalar_select %p22, %s24, %s15
    %p26 = scmp.ge.s32.totalorder %s25, 2
    %s27 = scalar_select %p26, 0, %s25
    %s28 = ssub.s32 %s15, %s27
    %s29 = ssub.s32 %s16, %s23
    %s30 = sor.u32 %s28, %s29
    %p31 = scmp.eq.s32.totalorder %s30, 0
    %s33 = sadd.s32 %s32, 1
    %s34 = scalar_select %p31, %s32, %s33
    %p37 = pneg %p31
    %p38 = scmp.eq.s32.totalorder %s8, 1
    %p39 = por %p37, %p38
    %p40 = scmp.ne.s32.totalorder %s32, %s35
    %p41 = scmp.eq.s32.totalorder %s8, 0
    %p42 = por %p40, %p41
    %p43 = scmp.ne.s32.totalorder %s32, %s35
    %p44 = scmp.eq.s32.totalorder %s13, 1
    %p45 = por %p43, %p44
    %p46 = scmp.ne.s32.totalorder %s35, %s36
    %p47 = scmp.eq.s32.totalorder %s13, 0
    %p48 = por %p46, %p47
    %p49 = scmp.ne.s32.totalorder %s35, %s36
    %p50 = scmp.eq.s32.totalorder %s14, 1
    %p51 = por %p49, %p50
    %p53 = scmp.ne.s32.totalorder %s36, %s52
    %p54 = scmp.eq.s32.totalorder %s14, 0
    %p55 = por %p53, %p54
    %s56 = ssub.s32 %s15, %s27
    %p57 = scmp.eq.s32.totalorder %s56, 0
    %s59 = sadd.s32 %s58, 1
    %s60 = scalar_select %p57, %s58, %s59
    %p63 = pneg %p57
    %p64 = scmp.eq.s32.totalorder %s8, 1
    %p65 = por %p63, %p64
    %p66 = scmp.ne.s32.totalorder %s58, %s61
    %p67 = scmp.eq.s32.totalorder %s8, 0
    %p68 = por %p66, %p67
    %p69 = scmp.ne.s32.totalorder %s58, %s61
    %p70 = scmp.eq.s32.totalorder %s13, 1
    %p71 = por %p69, %p70
    %p72 = scmp.ne.s32.totalorder %s61, %s62
    %p73 = scmp.eq.s32.totalorder %s13, 0
    %p74 = por %p72, %p73
    %p75 = scmp.ne.s32.totalorder %s61, %s62
    %p76 = scmp.eq.s32.totalorder %s14, 1
    %p77 = por %p75, %p76
    %p79 = scmp.ne.s32.totalorder %s62, %s78
    %p80 = scmp.eq.s32.totalorder %s14, 0
    %p81 = por %p79, %p80
    %s82 = ssub.s32 %s15, %s27
    %s83 = ssub.s32 %s16, %s23
    %s84 = sor.u32 %s82, %s83
    %p85 = scmp.eq.s32.totalorder %s84, 0
    %s87 = sadd.s32 %s86, 1
    %s88 = scalar_select %p85, %s86, %s87
    %p91 = pneg %p85
    %p92 = scmp.eq.s32.totalorder %s8, 1
    %p93 = por %p91, %p92
    %p94 = scmp.ne.s32.totalorder %s86, %s89
    %p95 = scmp.eq.s32.totalorder %s8, 0
    %p96 = por %p94, %p95
    %p97 = scmp.ne.s32.totalorder %s86, %s89
    %p98 = scmp.eq.s32.totalorder %s13, 1
    %p99 = por %p97, %p98
    %p100 = scmp.ne.s32.totalorder %s89, %s90
    %p101 = scmp.eq.s32.totalorder %s13, 0
    %p102 = por %p100, %p101
    %p103 = scmp.ne.s32.totalorder %s89, %s90
    %p104 = scmp.eq.s32.totalorder %s14, 1
    %p105 = por %p103, %p104
    %p107 = scmp.ne.s32.totalorder %s90, %s106
    %p108 = scmp.eq.s32.totalorder %s14, 0
    %p109 = por %p107, %p108
    %p110 = scmp.le.s32.totalorder 1, %s8
    %p111 = scmp.lt.s32.totalorder %s8, 3
    %p112 = pnand %p110, %p111
    %p113 = pneg %p112
    // Predicated region
    $region9: #{linear_attention.3} parent=5 // pred_check
      _
    $region10: #{linear_attention.3} parent=5 // pred_check_branch
      %115 = sbr.rel (%p112) target = $region12
    $region11: #{linear_attention.3} parent=5 // pred_region
      %s116 = ssub.s32 %s8, 1
    $region12: #{linear_attention.3} parent=5 // pred_fallthru
      _
    %p117 = scmp.lt.s32.totalorder %s8, 2
    // Predicated region
    $region13: #{linear_attention.3} parent=5 // pred_check
      %p118 = pneg %p117
    $region14: #{linear_attention.3} parent=5 // pred_check_branch
      %120 = sbr.rel (%p118) target = $region16
    $region15: #{linear_attention.3} parent=5 // pred_region
      // Predicated region
      $region17: #{linear_attention.3} parent=15 // pred_check
        %p121 = pneg %p42
      $region18: #{linear_attention.3} parent=15 // pred_check_branch
        %123 = sbr.rel (%p121) target = $region20
      $region19: #{linear_attention.3} parent=15 // pred_region
        %s124 = smul.u32 2, %s16
        %p125 = scmp.lt.s32.totalorder %s15, 1
        %s126 = scalar_select %p125, %s15, 1
        %p127 = scmp.lt.s32.totalorder %s124, 1
        %s128 = scalar_select %p127, %s124, 1
        %s129 = smul.addr %s126, 2
        %s130 = sadd.s32 %s128, %s129
        %s131 = smul.addr %s130, 8
        %s132 = scalar_lea.vmem %s0, %s131
        %s133 = smul.u32 2, %s16
      $region20: #{linear_attention.3} parent=15 // pred_fallthru
        _
      // Predicated region
      $region21: #{linear_attention.3} parent=15 // pred_check
        %p134 = pneg %p68
      $region22: #{linear_attention.3} parent=15 // pred_check_branch
        %136 = sbr.rel (%p134) target = $region24
      $region23: #{linear_attention.3} parent=15 // pred_region
        %p137 = scmp.lt.s32.totalorder %s15, 1
        %s138 = scalar_select %p137, %s15, 1
        %s139 = smul.addr %s138, 32
        %s140 = smul.addr %s139, 8
        %s141 = scalar_lea.vmem %s1, %s140
      $region24: #{linear_attention.3} parent=15 // pred_fallthru
        _
    $region16: #{linear_attention.3} parent=5 // pred_fallthru
      _
    %p142 = scmp.le.s32.totalorder 1, %s8
    %p143 = scmp.lt.s32.totalorder %s8, 3
    %p144 = pnand %p142, %p143
    %p145 = pneg %p144
    // Predicated region
    $region25: #{linear_attention.3} parent=5 // pred_check
      _
    $region26: #{linear_attention.3} parent=5 // pred_check_branch
      %147 = sbr.rel (%p144) target = $region28
    $region27: #{linear_attention.3} parent=5 // pred_region
      %s148 = ssub.s32 %s8, 1
      %s149 = smul.u32 2, %s18
      %p150 = scmp.lt.s32.totalorder %s17, 1
      %s151 = scalar_select %p150, %s17, 1
      %p152 = scmp.lt.s32.totalorder %s149, 1
      %s153 = scalar_select %p152, %s149, 1
      %s154 = smul.addr %s151, 2
      %s155 = sadd.s32 %s153, %s154
      %s156 = smul.addr %s155, 8
      %s157 = scalar_lea.vmem %s0, %s156
      %p158 = pneg %p48
      %p159 = pneg %p45
      %p160 = scmp.lt.s32.totalorder %s17, 1
      %s161 = scalar_select %p160, %s17, 1
      %s162 = smul.addr %s161, 32
      %s163 = smul.addr %s162, 8
      %s164 = scalar_lea.vmem %s1, %s163
      %p165 = pneg %p74
      %p166 = pneg %p71
      %p167 = pneg %p102
      %p168 = pneg %p99
      %s169 = smul.u32 2, %s18
      %p170 = scmp.lt.s32.totalorder %s17, 1
      %s171 = scalar_select %p170, %s17, 1
      %p172 = scmp.lt.s32.totalorder %s169, 1
      %s173 = scalar_select %p172, %s169, 1
      %s174 = smul.addr %s171, 2
      %s175 = sadd.s32 %s173, %s174
      %s176 = smul.addr %s175, 8
      %s177 = scalar_lea.vmem %s2, %s176
      %s178 = smul.u32 2, %s18
      %p179 = scmp.lt.s32.totalorder %s17, 1
      %s180 = scalar_select %p179, %s17, 1
      %p181 = scmp.lt.s32.totalorder %s178, 1
      %s182 = scalar_select %p181, %s178, 1
      %s183 = smul.addr %s180, 2
      %s184 = sadd.s32 %s182, %s183
      %s185 = smul.addr %s184, 8
      %s186 = scalar_lea.vmem %s0, %s185
      %s187 = smul.u32 2, %s18
      %p188 = scmp.lt.s32.totalorder %s17, 1
      %s189 = scalar_select %p188, %s17, 1
      %s190 = smul.addr %s189, 32
      %s191 = smul.addr %s190, 8
      %s192 = scalar_lea.vmem %s1, %s191
      %s193 = smul.u32 2, %s18
      %p194 = scmp.lt.s32.totalorder %s17, 1
      %s195 = scalar_select %p194, %s17, 1
      %p196 = scmp.lt.s32.totalorder %s193, 1
      %s197 = scalar_select %p196, %s193, 1
      %s198 = smul.addr %s195, 2
      %s199 = sadd.s32 %s197, %s198
      %s200 = smul.addr %s199, 8
      %s201 = scalar_lea.vmem %s2, %s200
      %s202 = smul.u32 2, %s18
      %v203 = vld [vmem:[%s186] sm:$0xff]
      %v204 = vld [vmem:[%s186 + $0x8] sm:$0xff]
      %vm205 = vcmp.gt.f32.partialorder %v203, 0.0
      %vm206 = vcmp.gt.f32.partialorder %v204, 0.0
      %v207 = vadd.f32 %v203, 1.0
      %v208 = vadd.f32 %v204, 1.0
      %v209 = vmul.f32 %v203, 1.442695
      %v210 = vpow.pop %v209
      %v211 = vmul.f32 %v204, 1.442695
      %v212 = vpow.pop %v211
      %v213 = vsel %vm205, %v207, %v210
      %v214 = vsel %vm206, %v208, %v212
      %v215 = vld [vmem:[%s192] sm:$0xff]
      %v216 = vld [vmem:[%s192 + $0x8] sm:$0xff]
      %v217 = vld [vmem:[%s192 + $0x10] sm:$0xff]
      %v218 = vld [vmem:[%s192 + $0x18] sm:$0xff]
      %v219 = vld [vmem:[%s192 + $0x20] sm:$0xff]
      %v220 = vld [vmem:[%s192 + $0x28] sm:$0xff]
      %v221 = vld [vmem:[%s192 + $0x30] sm:$0xff]
      %v222 = vld [vmem:[%s192 + $0x38] sm:$0xff]
      %v223 = vld [vmem:[%s192 + $0x40] sm:$0xff]
      %v224 = vld [vmem:[%s192 + $0x48] sm:$0xff]
      %v225 = vld [vmem:[%s192 + $0x50] sm:$0xff]
      %v226 = vld [vmem:[%s192 + $0x58] sm:$0xff]
      %v227 = vld [vmem:[%s192 + $0x60] sm:$0xff]
      %v228 = vld [vmem:[%s192 + $0x68] sm:$0xff]
      %v229 = vld [vmem:[%s192 + $0x70] sm:$0xff]
      %v230 = vld [vmem:[%s192 + $0x78] sm:$0xff]
      %v231 = vld [vmem:[%s192 + $0x80] sm:$0xff]
      %v232 = vld [vmem:[%s192 + $0x88] sm:$0xff]
      %v233 = vld [vmem:[%s192 + $0x90] sm:$0xff]
      %v234 = vld [vmem:[%s192 + $0x98] sm:$0xff]
      %v235 = vld [vmem:[%s192 + $0xa0] sm:$0xff]
      %v236 = vld [vmem:[%s192 + $0xa8] sm:$0xff]
      %v237 = vld [vmem:[%s192 + $0xb0] sm:$0xff]
      %v238 = vld [vmem:[%s192 + $0xb8] sm:$0xff]
      %v239 = vld [vmem:[%s192 + $0xc0] sm:$0xff]
      %v240 = vld [vmem:[%s192 + $0xc8] sm:$0xff]
      %v241 = vld [vmem:[%s192 + $0xd0] sm:$0xff]
      %v242 = vld [vmem:[%s192 + $0xd8] sm:$0xff]
      %v243 = vld [vmem:[%s192 + $0xe0] sm:$0xff]
      %v244 = vld [vmem:[%s192 + $0xe8] sm:$0xff]
      %v245 = vld [vmem:[%s192 + $0xf0] sm:$0xff]
      %v246 = vld [vmem:[%s192 + $0xf8] sm:$0xff]
      %247 = vmatprep.subr.mxu0 %v216
      %248 = vmatpush1.msra.mxu0 %v215
      %249 = vmatprep.subr.mxu0 %v218
      %250 = vmatpush1.msra.mxu0 %v217
      %251 = vmatprep.subr.mxu0 %v220
      %252 = vmatpush1.msra.mxu0 %v219
      %253 = vmatprep.subr.mxu0 %v222
      %254 = vmatpush1.msra.mxu0 %v221
      %255 = vmatprep.subr.mxu0 %v224
      %256 = vmatpush1.msra.mxu0 %v223
      %257 = vmatprep.subr.mxu0 %v226
      %258 = vmatpush1.msra.mxu0 %v225
      %259 = vmatprep.subr.mxu0 %v228
      %260 = vmatpush1.msra.mxu0 %v227
      %261 = vmatprep.subr.mxu0 %v230
      %262 = vmatpush1.msra.mxu0 %v229
      %263 = vmatprep.subr.mxu0 %v232
      %264 = vmatpush1.msra.mxu0 %v231
      %265 = vmatprep.subr.mxu0 %v234
      %266 = vmatpush1.msra.mxu0 %v233
      %267 = vmatprep.subr.mxu0 %v236
      %268 = vmatpush1.msra.mxu0 %v235
      %269 = vmatprep.subr.mxu0 %v238
      %270 = vmatpush1.msra.mxu0 %v237
      %271 = vmatprep.subr.mxu0 %v240
      %272 = vmatpush1.msra.mxu0 %v239
      %273 = vmatprep.subr.mxu0 %v242
      %274 = vmatpush1.msra.mxu0 %v241
      %275 = vmatprep.subr.mxu0 %v244
      %276 = vmatpush1.msra.mxu0 %v243
      %277 = vmatprep.subr.mxu0 %v246
      %278 = vmatpush1.msra.mxu0 %v245
      %279 = vmatprep.subr.mxu0 0.0
      %280 = vmatpush1.msra.mxu0 0.0
      %281 = vmatprep.subr.mxu0 0.0
      %282 = vmatpush1.msra.mxu0 0.0
      %283 = vmatprep.subr.mxu0 0.0
      %284 = vmatpush1.msra.mxu0 0.0
      %285 = vmatprep.subr.mxu0 0.0
      %286 = vmatpush1.msra.mxu0 0.0
      %287 = vmatprep.subr.mxu0 0.0
      %288 = vmatpush1.msra.mxu0 0.0
      %289 = vmatprep.subr.mxu0 0.0
      %290 = vmatpush1.msra.mxu0 0.0
      %291 = vmatprep.subr.mxu0 0.0
      %292 = vmatpush1.msra.mxu0 0.0
      %293 = vmatprep.subr.mxu0 0.0
      %294 = vmatpush1.msra.mxu0 0.0
      %295 = vmatprep.subr.mxu0 0.0
      %296 = vmatpush1.msra.mxu0 0.0
      %297 = vmatprep.subr.mxu0 0.0
      %298 = vmatpush1.msra.mxu0 0.0
      %299 = vmatprep.subr.mxu0 0.0
      %300 = vmatpush1.msra.mxu0 0.0
      %301 = vmatprep.subr.mxu0 0.0
      %302 = vmatpush1.msra.mxu0 0.0
      %303 = vmatprep.subr.mxu0 0.0
      %304 = vmatpush1.msra.mxu0 0.0
      %305 = vmatprep.subr.mxu0 0.0
      %306 = vmatpush1.msra.mxu0 0.0
      %307 = vmatprep.subr.mxu0 0.0
      %308 = vmatpush1.msra.mxu0 0.0
      %309 = vmatprep.subr.mxu0 0.0
      %310 = vmatpush1.msra.mxu0 0.0
      %311 = vmatprep.mubr.f32.mxu0 0.0
      %312 = vmatmul.mubr.f32.gmra.mrb[0].mxu0 %v213
      %v313 = vpop.f32.mrb[0].mxu0
      %v314 = vadd.f32 0.0, %v313
      %v315 = vpop.f32.mrb[0].mxu0
      %v316 = vadd.f32 0.0, %v315
      %317 = vmatprep.mubr.f32.mxu0 0.0
      %318 = vmatmul.mubr.f32.gmra.mrb[0].mxu0 %v214
      %v319 = vpop.f32.mrb[0].mxu0
      %v320 = vadd.f32 0.0, %v319
      %v321 = vpop.f32.mrb[0].mxu0
      %v322 = vadd.f32 0.0, %v321
      %323 = vdwg.mxu0
      %v324 = vadd.f32 %v316, 1e-06
      %v325 = vadd.f32 %v322, 1e-06
      %v326 = vrcp.pop %v324
      %v327 = vrcp.pop %v325
      %v328 = vmul.f32 %v324, %v326
      %v329 = vmul.f32 %v325, %v327
      %v330 = vsub.f32 2.0, %v328
      %v331 = vsub.f32 2.0, %v329
      %v332 = vmul.f32 %v326, %v330
      %v333 = vmul.f32 %v327, %v331
      %v334 = vmul.f32 %v314, %v332
      %v335 = vmul.f32 %v320, %v333
      %336 = vst [vmem:[%s201] sm:$0xff] %v334
      %337 = vst [vmem:[%s201 + $0x8] sm:$0xff] %v335
      %s338 = smul.u32 2, %s18
      %p339 = scmp.lt.s32.totalorder %s17, 1
      %s340 = scalar_select %p339, %s17, 1
      %p341 = scmp.lt.s32.totalorder %s338, 1
      %s342 = scalar_select %p341, %s338, 1
      %s343 = smul.addr %s340, 2
      %s344 = sadd.s32 %s342, %s343
      %s345 = smul.addr %s344, 8
      %s346 = scalar_lea.vmem %s2, %s345
      // Predicated region
      $region29: #{linear_attention.3} parent=27 // pred_check
        %p347 = pneg %p99
      $region30: #{linear_attention.3} parent=27 // pred_check_branch
        %349 = sbr.rel (%p347) target = $region32
      $region31: #{linear_attention.3} parent=27 // pred_region
        %s350 = smul.u32 2, %s18
      $region32: #{linear_attention.3} parent=27 // pred_fallthru
        _
    $region28: #{linear_attention.3} parent=5 // pred_fallthru
      _
    %p351 = scmp.le.s32.totalorder 2, %s8
    // Predicated region
    $region33: #{linear_attention.3} parent=5 // pred_check
      %p352 = pneg %p351
    $region34: #{linear_attention.3} parent=5 // pred_check_branch
      %354 = sbr.rel (%p352) target = $region36
    $region35: #{linear_attention.3} parent=5 // pred_region
      %s355 = ssub.s32 %s8, 2
      // Predicated region
      $region37: #{linear_attention.3} parent=35 // pred_check
        %p356 = pneg %p105
      $region38: #{linear_attention.3} parent=35 // pred_check_branch
        %358 = sbr.rel (%p356) target = $region40
      $region39: #{linear_attention.3} parent=35 // pred_region
        %s359 = smul.u32 2, %s20
        %p360 = scmp.lt.s32.totalorder %s19, 1
        %s361 = scalar_select %p360, %s19, 1
        %p362 = scmp.lt.s32.totalorder %s359, 1
        %s363 = scalar_select %p362, %s359, 1
        %s364 = smul.addr %s361, 2
        %s365 = sadd.s32 %s363, %s364
        %s366 = smul.addr %s365, 8
        %s367 = scalar_lea.vmem %s2, %s366
      $region40: #{linear_attention.3} parent=35 // pred_fallthru
        _
    $region36: #{linear_attention.3} parent=5 // pred_fallthru
      _
  $region6: #{linear_attention.3} parent=0 // loop_footer
    %s12 = sadd.s32 1, %s8
  $region7: #{linear_attention.3} parent=0 // loop_footer_branch
    %7 = sbr.rel target = $region3
  $region8: #{linear_attention.3} parent=0 // loop_exit
    _

// kernel: linear_attention.2
$region0: #{linear_attention.2}
  #allocation0 [shape = 'u32[]', space=smem, size = 0x4, offset = 0x4, fixed_abs, tag = 'smem constant byte address 0x4 - core index']
  #allocation1 [shape = 'u32[144,128]{1,0:T(1,128)}', space=vmem, size = 0x12000, scoped, tag = 'internal scratch']
  #allocation2 [shape = 'f32[128,128]{1,0:T(8,128)}', space=vmem, size = 0x10000, scoped, tag = 'scratch operand']
  #allocation3 [shape = 'f32[128,128]{1,0:T(8,128)}', space=vmem, size = 0x10000, scoped, tag = 'scratch operand']
  %s0 = inlined_call_operand.vmem [shape: f32[128,128], index: 0, kind: input, shape index: {}]
  %s1 = inlined_call_operand.vmem [shape: f32[2,8,128], index: 1, kind: input, shape index: {}]
  %s2 = inlined_call_operand.vmem [shape: f32[2,8,128], index: 2, kind: input, shape index: {}]
  %s3 = inlined_call_operand.vmem [shape: f32[2,128,256], index: 3, kind: output, shape index: {}]
  %s4 = sld [smem:[#allocation0]]
  $region53: #{linear_attention.2} parent=0
    _
  %s6 = ssub.s32 1, %s4
  %s7 = scalar_select 0, %s6, %s4
  loop: start=0, step=1, limit=4
  $region2: #{linear_attention.2} parent=0 // loop_pre_header
    _
  $region3: #{linear_attention.2} parent=0 // loop_header
    %s9 = sphi 0, %s13
    %p10 = scmp.ge.s32.totalorder %s9, 4
    %s16 = sphi 0, %s28
    %s17 = sphi 0, %s24
    %s18 = sphi 0, %s16
    %s19 = sphi 0, %s17
    %s20 = sphi 0, %s18
    %s21 = sphi 0, %s19
    %s29 = sphi 0, %s29
    %s31 = sphi 0, %s29
    %s32 = sphi 0, %s31
    %s46 = sphi 0, %s32
    %s54 = sphi 0, %s56
    %s57 = sphi 0, %s54
    %s58 = sphi 0, %s57
    %s74 = sphi 0, %s58
    %s82 = sphi 0, %s84
    %s85 = sphi 0, %s82
    %s86 = sphi 0, %s85
    %s102 = sphi 0, %s86
    %s108 = sphi 0, %s110
    %s111 = sphi 0, %s108
    %s112 = sphi 0, %s111
    %s128 = sphi 0, %s112
  $region4: #{linear_attention.2} parent=0 // loop_header_branch
    %12 = sbr.rel (%p10) target = $region8
  $region5: #{linear_attention.2} parent=0 // loop_body
    %s14 = ssub.s32 %s9, 1
    %s15 = ssub.s32 %s9, 2
    %s22 = sadd.s32 1, %s17
    %p23 = scmp.ge.s32.totalorder %s22, 1
    %s24 = scalar_select %p23, 0, %s22
    %s25 = sadd.s32 1, %s16
    %s26 = scalar_select %p23, %s25, %s16
    %p27 = scmp.ge.s32.totalorder %s26, 2
    %s28 = scalar_select %p27, 0, %s26
    %s30 = sadd.s32 %s29, 1
    %p33 = scmp.eq.s32.totalorder %s9, 1
    %p34 = scmp.ne.s32.totalorder %s29, %s31
    %p35 = scmp.eq.s32.totalorder %s9, 0
    %p36 = por %p34, %p35
    %p37 = scmp.ne.s32.totalorder %s29, %s31
    %p38 = scmp.eq.s32.totalorder %s14, 1
    %p39 = por %p37, %p38
    %p40 = scmp.ne.s32.totalorder %s31, %s32
    %p41 = scmp.eq.s32.totalorder %s14, 0
    %p42 = por %p40, %p41
    %p43 = scmp.ne.s32.totalorder %s31, %s32
    %p44 = scmp.eq.s32.totalorder %s15, 1
    %p45 = por %p43, %p44
    %p47 = scmp.ne.s32.totalorder %s32, %s46
    %p48 = scmp.eq.s32.totalorder %s15, 0
    %p49 = por %p47, %p48
    %s50 = ssub.s32 %s16, %s28
    %s51 = ssub.s32 %s17, %s24
    %s52 = sor.u32 %s50, %s51
    %p53 = scmp.eq.s32.totalorder %s52, 0
    %s55 = sadd.s32 %s54, 1
    %s56 = scalar_select %p53, %s54, %s55
    %p59 = pneg %p53
    %p60 = scmp.eq.s32.totalorder %s9, 1
    %p61 = por %p59, %p60
    %p62 = scmp.ne.s32.totalorder %s54, %s57
    %p63 = scmp.eq.s32.totalorder %s9, 0
    %p64 = por %p62, %p63
    %p65 = scmp.ne.s32.totalorder %s54, %s57
    %p66 = scmp.eq.s32.totalorder %s14, 1
    %p67 = por %p65, %p66
    %p68 = scmp.ne.s32.totalorder %s57, %s58
    %p69 = scmp.eq.s32.totalorder %s14, 0
    %p70 = por %p68, %p69
    %p71 = scmp.ne.s32.totalorder %s57, %s58
    %p72 = scmp.eq.s32.totalorder %s15, 1
    %p73 = por %p71, %p72
    %p75 = scmp.ne.s32.totalorder %s58, %s74
    %p76 = scmp.eq.s32.totalorder %s15, 0
    %p77 = por %p75, %p76
    %s78 = ssub.s32 %s16, %s28
    %s79 = ssub.s32 %s17, %s24
    %s80 = sor.u32 %s78, %s79
    %p81 = scmp.eq.s32.totalorder %s80, 0
    %s83 = sadd.s32 %s82, 1
    %s84 = scalar_select %p81, %s82, %s83
    %p87 = pneg %p81
    %p88 = scmp.eq.s32.totalorder %s9, 1
    %p89 = por %p87, %p88
    %p90 = scmp.ne.s32.totalorder %s82, %s85
    %p91 = scmp.eq.s32.totalorder %s9, 0
    %p92 = por %p90, %p91
    %p93 = scmp.ne.s32.totalorder %s82, %s85
    %p94 = scmp.eq.s32.totalorder %s14, 1
    %p95 = por %p93, %p94
    %p96 = scmp.ne.s32.totalorder %s85, %s86
    %p97 = scmp.eq.s32.totalorder %s14, 0
    %p98 = por %p96, %p97
    %p99 = scmp.ne.s32.totalorder %s85, %s86
    %p100 = scmp.eq.s32.totalorder %s15, 1
    %p101 = por %p99, %p100
    %p103 = scmp.ne.s32.totalorder %s86, %s102
    %p104 = scmp.eq.s32.totalorder %s15, 0
    %p105 = por %p103, %p104
    %s106 = ssub.s32 %s16, %s28
    %p107 = scmp.eq.s32.totalorder %s106, 0
    %s109 = sadd.s32 %s108, 1
    %s110 = scalar_select %p107, %s108, %s109
    %p113 = pneg %p107
    %p114 = scmp.eq.s32.totalorder %s9, 1
    %p115 = por %p113, %p114
    %p116 = scmp.ne.s32.totalorder %s108, %s111
    %p117 = scmp.eq.s32.totalorder %s9, 0
    %p118 = por %p116, %p117
    %p119 = scmp.ne.s32.totalorder %s108, %s111
    %p120 = scmp.eq.s32.totalorder %s14, 1
    %p121 = por %p119, %p120
    %p122 = scmp.ne.s32.totalorder %s111, %s112
    %p123 = scmp.eq.s32.totalorder %s14, 0
    %p124 = por %p122, %p123
    %p125 = scmp.ne.s32.totalorder %s111, %s112
    %p126 = scmp.eq.s32.totalorder %s15, 1
    %p127 = por %p125, %p126
    %p129 = scmp.ne.s32.totalorder %s112, %s128
    %p130 = scmp.eq.s32.totalorder %s15, 0
    %p131 = por %p129, %p130
    %p132 = scmp.le.s32.totalorder 1, %s9
    %p133 = scmp.lt.s32.totalorder %s9, 3
    %p134 = pnand %p132, %p133
    %p135 = pneg %p134
    // Predicated region
    $region9: #{linear_attention.2} parent=5 // pred_check
      _
    $region10: #{linear_attention.2} parent=5 // pred_check_branch
      %137 = sbr.rel (%p134) target = $region12
    $region11: #{linear_attention.2} parent=5 // pred_region
      %s138 = ssub.s32 %s9, 1
      // Predicated region
      $region13: #{linear_attention.2} parent=11 // pred_check
        %p139 = pneg %p42
      $region14: #{linear_attention.2} parent=11 // pred_check_branch
        %141 = sbr.rel (%p139) target = $region16
      $region15: #{linear_attention.2} parent=11 // pred_region
        _
      $region16: #{linear_attention.2} parent=11 // pred_fallthru
        _
    $region12: #{linear_attention.2} parent=5 // pred_fallthru
      _
    %p142 = scmp.lt.s32.totalorder %s9, 2
    // Predicated region
    $region17: #{linear_attention.2} parent=5 // pred_check
      %p143 = pneg %p142
    $region18: #{linear_attention.2} parent=5 // pred_check_branch
      %145 = sbr.rel (%p143) target = $region20
    $region19: #{linear_attention.2} parent=5 // pred_region
      // Predicated region
      $region21: #{linear_attention.2} parent=19 // pred_check
        %p146 = pneg %p64
      $region22: #{linear_attention.2} parent=19 // pred_check_branch
        %148 = sbr.rel (%p146) target = $region24
      $region23: #{linear_attention.2} parent=19 // pred_region
        %p149 = scmp.lt.s32.totalorder %s16, 1
        %s150 = scalar_select %p149, %s16, 1
        %p151 = scmp.lt.s32.totalorder %s17, 0
        %s152 = scalar_select %p151, %s17, 0
        %s153 = sadd.s32 %s152, %s150
        %s154 = smul.addr %s153, 8
        %s155 = scalar_lea.vmem %s1, %s154
      $region24: #{linear_attention.2} parent=19 // pred_fallthru
        _
      // Predicated region
      $region25: #{linear_attention.2} parent=19 // pred_check
        %p156 = pneg %p92
      $region26: #{linear_attention.2} parent=19 // pred_check_branch
        %158 = sbr.rel (%p156) target = $region28
      $region27: #{linear_attention.2} parent=19 // pred_region
        %p159 = scmp.lt.s32.totalorder %s16, 1
        %s160 = scalar_select %p159, %s16, 1
        %p161 = scmp.lt.s32.totalorder %s17, 0
        %s162 = scalar_select %p161, %s17, 0
        %s163 = sadd.s32 %s162, %s160
        %s164 = smul.addr %s163, 8
        %s165 = scalar_lea.vmem %s2, %s164
      $region28: #{linear_attention.2} parent=19 // pred_fallthru
        _
    $region20: #{linear_attention.2} parent=5 // pred_fallthru
      _
    %p166 = scmp.le.s32.totalorder 1, %s9
    %p167 = scmp.lt.s32.totalorder %s9, 3
    %p168 = pnand %p166, %p167
    %p169 = pneg %p168
    // Predicated region
    $region29: #{linear_attention.2} parent=5 // pred_check
      _
    $region30: #{linear_attention.2} parent=5 // pred_check_branch
      %171 = sbr.rel (%p168) target = $region32
    $region31: #{linear_attention.2} parent=5 // pred_region
      %s172 = ssub.s32 %s9, 1
      %p173 = pneg %p42
      %p174 = pneg %p39
      %p175 = scmp.lt.s32.totalorder %s18, 1
      %s176 = scalar_select %p175, %s18, 1
      %p177 = scmp.lt.s32.totalorder %s19, 0
      %s178 = scalar_select %p177, %s19, 0
      %s179 = sadd.s32 %s178, %s176
      %s180 = smul.addr %s179, 8
      %s181 = scalar_lea.vmem %s1, %s180
      %p182 = pneg %p70
      %p183 = pneg %p67
      %p184 = scmp.lt.s32.totalorder %s18, 1
      %s185 = scalar_select %p184, %s18, 1
      %p186 = scmp.lt.s32.totalorder %s19, 0
      %s187 = scalar_select %p186, %s19, 0
      %s188 = sadd.s32 %s187, %s185
      %s189 = smul.addr %s188, 8
      %s190 = scalar_lea.vmem %s2, %s189
      %p191 = pneg %p98
      %p192 = pneg %p95
      %p193 = pneg %p124
      %p194 = pneg %p121
      %p195 = scmp.lt.s32.totalorder %s18, 1
      %s196 = scalar_select %p195, %s18, 1
      %s197 = smul.addr %s196, 32
      %s198 = smul.addr %s197, 8
      %s199 = scalar_lea.vmem %s3, %s198
      %p200 = scmp.lt.s32.totalorder %s18, 1
      %s201 = scalar_select %p200, %s18, 1
      %p202 = scmp.lt.s32.totalorder %s19, 0
      %s203 = scalar_select %p202, %s19, 0
      %s204 = sadd.s32 %s203, %s201
      %s205 = smul.addr %s204, 8
      %s206 = scalar_lea.vmem %s1, %s205
      %p207 = scmp.lt.s32.totalorder %s18, 1
      %s208 = scalar_select %p207, %s18, 1
      %p209 = scmp.lt.s32.totalorder %s19, 0
      %s210 = scalar_select %p209, %s19, 0
      %s211 = sadd.s32 %s210, %s208
      %s212 = smul.addr %s211, 8
      %s213 = scalar_lea.vmem %s2, %s212
      %p214 = scmp.lt.s32.totalorder %s18, 1
      %s215 = scalar_select %p214, %s18, 1
      %s216 = smul.addr %s215, 32
      %s217 = smul.addr %s216, 8
      %s218 = scalar_lea.vmem %s3, %s217
      %p219 = scmp.eq.s32.totalorder %s19, 0
      // Predicated region
      $region33: #{linear_attention.2} parent=31 // pred_check
        %p220 = pneg %p219
      $region34: #{linear_attention.2} parent=31 // pred_check_branch
        %222 = sbr.rel (%p220) target = $region36
      $region35: #{linear_attention.2} parent=31 // pred_region
        %223 = vst [vmem:[#allocation2] sm:$0xff] 0.0
        %224 = vst [vmem:[#allocation2 + $0x8] sm:$0xff] 0.0
        %225 = vst [vmem:[#allocation2 + $0x10] sm:$0xff] 0.0
        %226 = vst [vmem:[#allocation2 + $0x18] sm:$0xff] 0.0
        %227 = vst [vmem:[#allocation2 + $0x20] sm:$0xff] 0.0
        %228 = vst [vmem:[#allocation2 + $0x28] sm:$0xff] 0.0
        %229 = vst [vmem:[#allocation2 + $0x30] sm:$0xff] 0.0
        %230 = vst [vmem:[#allocation2 + $0x38] sm:$0xff] 0.0
        %231 = vst [vmem:[#allocation2 + $0x40] sm:$0xff] 0.0
        %232 = vst [vmem:[#allocation2 + $0x48] sm:$0xff] 0.0
        %233 = vst [vmem:[#allocation2 + $0x50] sm:$0xff] 0.0
        %234 = vst [vmem:[#allocation2 + $0x58] sm:$0xff] 0.0
        %235 = vst [vmem:[#allocation2 + $0x60] sm:$0xff] 0.0
        %236 = vst [vmem:[#allocation2 + $0x68] sm:$0xff] 0.0
        %237 = vst [vmem:[#allocation2 + $0x70] sm:$0xff] 0.0
        %238 = vst [vmem:[#allocation2 + $0x78] sm:$0xff] 0.0
        %239 = vst [vmem:[#allocation3] sm:$0xff] 0.0
        %240 = vst [vmem:[#allocation3 + $0x8] sm:$0xff] 0.0
        %241 = vst [vmem:[#allocation3 + $0x10] sm:$0xff] 0.0
        %242 = vst [vmem:[#allocation3 + $0x18] sm:$0xff] 0.0
        %243 = vst [vmem:[#allocation3 + $0x20] sm:$0xff] 0.0
        %244 = vst [vmem:[#allocation3 + $0x28] sm:$0xff] 0.0
        %245 = vst [vmem:[#allocation3 + $0x30] sm:$0xff] 0.0
        %246 = vst [vmem:[#allocation3 + $0x38] sm:$0xff] 0.0
        %247 = vst [vmem:[#allocation3 + $0x40] sm:$0xff] 0.0
        %248 = vst [vmem:[#allocation3 + $0x48] sm:$0xff] 0.0
        %249 = vst [vmem:[#allocation3 + $0x50] sm:$0xff] 0.0
        %250 = vst [vmem:[#allocation3 + $0x58] sm:$0xff] 0.0
        %251 = vst [vmem:[#allocation3 + $0x60] sm:$0xff] 0.0
        %252 = vst [vmem:[#allocation3 + $0x68] sm:$0xff] 0.0
        %253 = vst [vmem:[#allocation3 + $0x70] sm:$0xff] 0.0
        %254 = vst [vmem:[#allocation3 + $0x78] sm:$0xff] 0.0
      $region36: #{linear_attention.2} parent=31 // pred_fallthru
        _
      %v255 = vld [vmem:[%s206] sm:$0xff]
      %vm256 = vcmp.gt.f32.partialorder %v255, 0.0
      %v257 = vadd.f32 %v255, 1.0
      %v258 = vmul.f32 %v255, 1.442695
      %v259 = vpow.pop %v258
      %v260 = vsel %vm256, %v257, %v259
      %v261 = vld [vmem:[%s213] sm:$0xff]
      %v262 = vld [vmem:[#allocation2] sm:$0xff]
      %v263 = vld [vmem:[#allocation2 + $0x8] sm:$0xff]
      %v264 = vld [vmem:[#allocation2 + $0x10] sm:$0xff]
      %v265 = vld [vmem:[#allocation2 + $0x18] sm:$0xff]
      %v266 = vld [vmem:[#allocation2 + $0x20] sm:$0xff]
      %v267 = vld [vmem:[#allocation2 + $0x28] sm:$0xff]
      %v268 = vld [vmem:[#allocation2 + $0x30] sm:$0xff]
      %v269 = vld [vmem:[#allocation2 + $0x38] sm:$0xff]
      %v270 = vld [vmem:[#allocation2 + $0x40] sm:$0xff]
      %v271 = vld [vmem:[#allocation2 + $0x48] sm:$0xff]
      %v272 = vld [vmem:[#allocation2 + $0x50] sm:$0xff]
      %v273 = vld [vmem:[#allocation2 + $0x58] sm:$0xff]
      %v274 = vld [vmem:[#allocation2 + $0x60] sm:$0xff]
      %v275 = vld [vmem:[#allocation2 + $0x68] sm:$0xff]
      %v276 = vld [vmem:[#allocation2 + $0x70] sm:$0xff]
      %v277 = vld [vmem:[#allocation2 + $0x78] sm:$0xff]
      %278 = vxpose.xlu0.b32.start [1/16] %v260, 128
      %279 = vxpose.xlu0.b32.cont [2/16] 0.0, 128
      %280 = vxpose.xlu0.b32.cont [3/16] 0.0, 128
      %281 = vxpose.xlu0.b32.cont [4/16] 0.0, 128
      %282 = vxpose.xlu0.b32.cont [5/16] 0.0, 128
      %283 = vxpose.xlu0.b32.cont [6/16] 0.0, 128
      %284 = vxpose.xlu0.b32.cont [7/16] 0.0, 128
      %285 = vxpose.xlu0.b32.cont [8/16] 0.0, 128
      %286 = vxpose.xlu0.b32.cont [9/16] 0.0, 128
      %287 = vxpose.xlu0.b32.cont [10/16] 0.0, 128
      %288 = vxpose.xlu0.b32.cont [11/16] 0.0, 128
      %289 = vxpose.xlu0.b32.cont [12/16] 0.0, 128
      %290 = vxpose.xlu0.b32.cont [13/16] 0.0, 128
      %291 = vxpose.xlu0.b32.cont [14/16] 0.0, 128
      %292 = vxpose.xlu0.b32.cont [15/16] 0.0, 128
      %293 = vxpose.xlu0.b32.end [16/16] 0.0, 128
      %v294 = vpop.trf.xlu0
      %v295 = vpop.trf.xlu0
      %v296 = vpop.trf.xlu0
      %v297 = vpop.trf.xlu0
      %v298 = vpop.trf.xlu0
      %v299 = vpop.trf.xlu0
      %v300 = vpop.trf.xlu0
      %v301 = vpop.trf.xlu0
      %v302 = vpop.trf.xlu0
      %v303 = vpop.trf.xlu0
      %v304 = vpop.trf.xlu0
      %v305 = vpop.trf.xlu0
      %v306 = vpop.trf.xlu0
      %v307 = vpop.trf.xlu0
      %v308 = vpop.trf.xlu0
      %v309 = vpop.trf.xlu0
      %vm310 = vcmask 64512
      %v312 = vsel %vm310, %v294, 0
      %v315 = vsel %vm310, %v295, 0
      %v318 = vsel %vm310, %v296, 0
      %v321 = vsel %vm310, %v297, 0
      %v324 = vsel %vm310, %v298, 0
      %v327 = vsel %vm310, %v299, 0
      %v330 = vsel %vm310, %v300, 0
      %v333 = vsel %vm310, %v301, 0
      %v336 = vsel %vm310, %v302, 0
      %v339 = vsel %vm310, %v303, 0
      %v342 = vsel %vm310, %v304, 0
      %v345 = vsel %vm310, %v305, 0
      %v348 = vsel %vm310, %v306, 0
      %v351 = vsel %vm310, %v307, 0
      %v354 = vsel %vm310, %v308, 0
      %v357 = vsel %vm310, %v309, 0
      %359 = vmatprep.subr.mxu0 0.0
      %360 = vmatpush1.msra.mxu0 %v261
      %361 = vmatprep.subr.mxu0 0.0
      %362 = vmatpush1.msra.mxu0 0.0
      %363 = vmatprep.subr.mxu0 0.0
      %364 = vmatpush1.msra.mxu0 0.0
      %365 = vmatprep.subr.mxu0 0.0
      %366 = vmatpush1.msra.mxu0 0.0
      %367 = vmatprep.subr.mxu0 0.0
      %368 = vmatpush1.msra.mxu0 0.0
      %369 = vmatprep.subr.mxu0 0.0
      %370 = vmatpush1.msra.mxu0 0.0
      %371 = vmatprep.subr.mxu0 0.0
      %372 = vmatpush1.msra.mxu0 0.0
      %373 = vmatprep.subr.mxu0 0.0
      %374 = vmatpush1.msra.mxu0 0.0
      %375 = vmatprep.subr.mxu0 0.0
      %376 = vmatpush1.msra.mxu0 0.0
      %377 = vmatprep.subr.mxu0 0.0
      %378 = vmatpush1.msra.mxu0 0.0
      %379 = vmatprep.subr.mxu0 0.0
      %380 = vmatpush1.msra.mxu0 0.0
      %381 = vmatprep.subr.mxu0 0.0
      %382 = vmatpush1.msra.mxu0 0.0
      %383 = vmatprep.subr.mxu0 0.0
      %384 = vmatpush1.msra.mxu0 0.0
      %385 = vmatprep.subr.mxu0 0.0
      %386 = vmatpush1.msra.mxu0 0.0
      %387 = vmatprep.subr.mxu0 0.0
      %388 = vmatpush1.msra.mxu0 0.0
      %389 = vmatprep.subr.mxu0 0.0
      %390 = vmatpush1.msra.mxu0 0.0
      %391 = vmatprep.subr.mxu0 0.0
      %392 = vmatpush1.msra.mxu0 0.0
      %393 = vmatprep.subr.mxu0 0.0
      %394 = vmatpush1.msra.mxu0 0.0
      %395 = vmatprep.subr.mxu0 0.0
      %396 = vmatpush1.msra.mxu0 0.0
      %397 = vmatprep.subr.mxu0 0.0
      %398 = vmatpush1.msra.mxu0 0.0
      %399 = vmatprep.subr.mxu0 0.0
      %400 = vmatpush1.msra.mxu0 0.0
      %401 = vmatprep.subr.mxu0 0.0
      %402 = vmatpush1.msra.mxu0 0.0
      %403 = vmatprep.subr.mxu0 0.0
      %404 = vmatpush1.msra.mxu0 0.0
      %405 = vmatprep.subr.mxu0 0.0
      %406 = vmatpush1.msra.mxu0 0.0
      %407 = vmatprep.subr.mxu0 0.0
      %408 = vmatpush1.msra.mxu0 0.0
      %409 = vmatprep.subr.mxu0 0.0
      %410 = vmatpush1.msra.mxu0 0.0
      %411 = vmatprep.subr.mxu0 0.0
      %412 = vmatpush1.msra.mxu0 0.0
      %413 = vmatprep.subr.mxu0 0.0
      %414 = vmatpush1.msra.mxu0 0.0
      %415 = vmatprep.subr.mxu0 0.0
      %416 = vmatpush1.msra.mxu0 0.0
      %417 = vmatprep.subr.mxu0 0.0
      %418 = vmatpush1.msra.mxu0 0.0
      %419 = vmatprep.subr.mxu0 0.0
      %420 = vmatpush1.msra.mxu0 0.0
      %421 = vmatprep.subr.mxu0 0.0
      %422 = vmatpush1.msra.mxu0 0.0
      %423 = vmatprep.mubr.f32.mxu0 0.0
      %424 = vmatmul.mubr.f32.gmra.mrb[0].mxu0 %v312
      %v425 = vpop.f32.mrb[0].mxu0
      %v426 = vadd.f32 0.0, %v425
      %v427 = vpop.f32.mrb[0].mxu0
      %428 = vmatprep.mubr.f32.mxu0 0.0
      %429 = vmatmul.mubr.f32.gmra.mrb[0].mxu0 %v315
      %v430 = vpop.f32.mrb[0].mxu0
      %v431 = vadd.f32 0.0, %v430
      %v432 = vpop.f32.mrb[0].mxu0
      %433 = vmatprep.mubr.f32.mxu0 0.0
      %434 = vmatmul.mubr.f32.gmra.mrb[0].mxu0 %v318
      %v435 = vpop.f32.mrb[0].mxu0
      %v436 = vadd.f32 0.0, %v435
      %v437 = vpop.f32.mrb[0].mxu0
      %438 = vmatprep.mubr.f32.mxu0 0.0
      %439 = vmatmul.mubr.f32.gmra.mrb[0].mxu0 %v321
      %v440 = vpop.f32.mrb[0].mxu0
      %v441 = vadd.f32 0.0, %v440
      %v442 = vpop.f32.mrb[0].mxu0
      %443 = vmatprep.mubr.f32.mxu0 0.0
      %444 = vmatmul.mubr.f32.gmra.mrb[0].mxu0 %v324
      %v445 = vpop.f32.mrb[0].mxu0
      %v446 = vadd.f32 0.0, %v445
      %v447 = vpop.f32.mrb[0].mxu0
      %448 = vmatprep.mubr.f32.mxu0 0.0
      %449 = vmatmul.mubr.f32.gmra.mrb[0].mxu0 %v327
      %v450 = vpop.f32.mrb[0].mxu0
      %v451 = vadd.f32 0.0, %v450
      %v452 = vpop.f32.mrb[0].mxu0
      %453 = vmatprep.mubr.f32.mxu0 0.0
      %454 = vmatmul.mubr.f32.gmra.mrb[0].mxu0 %v330
      %v455 = vpop.f32.mrb[0].mxu0
      %v456 = vadd.f32 0.0, %v455
      %v457 = vpop.f32.mrb[0].mxu0
      %458 = vmatprep.mubr.f32.mxu0 0.0
      %459 = vmatmul.mubr.f32.gmra.mrb[0].mxu0 %v333
      %v460 = vpop.f32.mrb[0].mxu0
      %v461 = vadd.f32 0.0, %v460
      %v462 = vpop.f32.mrb[0].mxu0
      %463 = vmatprep.mubr.f32.mxu0 0.0
      %464 = vmatmul.mubr.f32.gmra.mrb[0].mxu0 %v336
      %v465 = vpop.f32.mrb[0].mxu0
      %v466 = vadd.f32 0.0, %v465
      %v467 = vpop.f32.mrb[0].mxu0
      %468 = vmatprep.mubr.f32.mxu0 0.0
      %469 = vmatmul.mubr.f32.gmra.mrb[0].mxu0 %v339
      %v470 = vpop.f32.mrb[0].mxu0
      %v471 = vadd.f32 0.0, %v470
      %v472 = vpop.f32.mrb[0].mxu0
      %473 = vmatprep.mubr.f32.mxu0 0.0
      %474 = vmatmul.mubr.f32.gmra.mrb[0].mxu0 %v342
      %v475 = vpop.f32.mrb[0].mxu0
      %v476 = vadd.f32 0.0, %v475
      %v477 = vpop.f32.mrb[0].mxu0
      %478 = vmatprep.mubr.f32.mxu0 0.0
      %479 = vmatmul.mubr.f32.gmra.mrb[0].mxu0 %v345
      %v480 = vpop.f32.mrb[0].mxu0
      %v481 = vadd.f32 0.0, %v480
      %v482 = vpop.f32.mrb[0].mxu0
      %483 = vmatprep.mubr.f32.mxu0 0.0
      %484 = vmatmul.mubr.f32.gmra.mrb[0].mxu0 %v348
      %v485 = vpop.f32.mrb[0].mxu0
      %v486 = vadd.f32 0.0, %v485
      %v487 = vpop.f32.mrb[0].mxu0
      %488 = vmatprep.mubr.f32.mxu0 0.0
      %489 = vmatmul.mubr.f32.gmra.mrb[0].mxu0 %v351
      %v490 = vpop.f32.mrb[0].mxu0
      %v491 = vadd.f32 0.0, %v490
      %v492 = vpop.f32.mrb[0].mxu0
      %493 = vmatprep.mubr.f32.mxu0 0.0
      %494 = vmatmul.mubr.f32.gmra.mrb[0].mxu0 %v354
      %v495 = vpop.f32.mrb[0].mxu0
      %v496 = vadd.f32 0.0, %v495
      %v497 = vpop.f32.mrb[0].mxu0
      %498 = vmatprep.mubr.f32.mxu0 0.0
      %499 = vmatmul.mubr.f32.gmra.mrb[0].mxu0 %v357
      %v500 = vpop.f32.mrb[0].mxu0
      %v501 = vadd.f32 0.0, %v500
      %v502 = vpop.f32.mrb[0].mxu0
      %503 = vdwg.mxu0
      %v504 = vadd.f32 %v262, %v426
      %v505 = vadd.f32 %v263, %v431
      %v506 = vadd.f32 %v264, %v436
      %v507 = vadd.f32 %v265, %v441
      %v508 = vadd.f32 %v266, %v446
      %v509 = vadd.f32 %v267, %v451
      %v510 = vadd.f32 %v268, %v456
      %v511 = vadd.f32 %v269, %v461
      %v512 = vadd.f32 %v270, %v466
      %v513 = vadd.f32 %v271, %v471
      %v514 = vadd.f32 %v272, %v476
      %v515 = vadd.f32 %v273, %v481
      %v516 = vadd.f32 %v274, %v486
      %v517 = vadd.f32 %v275, %v491
      %v518 = vadd.f32 %v276, %v496
      %v519 = vadd.f32 %v277, %v501
      %520 = vst [vmem:[#allocation2] sm:$0xff] %v504
      %521 = vst [vmem:[#allocation2 + $0x8] sm:$0xff] %v505
      %522 = vst [vmem:[#allocation2 + $0x10] sm:$0xff] %v506
      %523 = vst [vmem:[#allocation2 + $0x18] sm:$0xff] %v507
      %524 = vst [vmem:[#allocation2 + $0x20] sm:$0xff] %v508
      %525 = vst [vmem:[#allocation2 + $0x28] sm:$0xff] %v509
      %526 = vst [vmem:[#allocation2 + $0x30] sm:$0xff] %v510
      %527 = vst [vmem:[#allocation2 + $0x38] sm:$0xff] %v511
      %528 = vst [vmem:[#allocation2 + $0x40] sm:$0xff] %v512
      %529 = vst [vmem:[#allocation2 + $0x48] sm:$0xff] %v513
      %530 = vst [vmem:[#allocation2 + $0x50] sm:$0xff] %v514
      %531 = vst [vmem:[#allocation2 + $0x58] sm:$0xff] %v515
      %532 = vst [vmem:[#allocation2 + $0x60] sm:$0xff] %v516
      %533 = vst [vmem:[#allocation2 + $0x68] sm:$0xff] %v517
      %534 = vst [vmem:[#allocation2 + $0x70] sm:$0xff] %v518
      %535 = vst [vmem:[#allocation2 + $0x78] sm:$0xff] %v519
      %v536 = vld [vmem:[#allocation3] sm:$0xff]
      %v537 = vld [vmem:[#allocation3 + $0x8] sm:$0xff]
      %v538 = vld [vmem:[#allocation3 + $0x10] sm:$0xff]
      %v539 = vld [vmem:[#allocation3 + $0x18] sm:$0xff]
      %v540 = vld [vmem:[#allocation3 + $0x20] sm:$0xff]
      %v541 = vld [vmem:[#allocation3 + $0x28] sm:$0xff]
      %v542 = vld [vmem:[#allocation3 + $0x30] sm:$0xff]
      %v543 = vld [vmem:[#allocation3 + $0x38] sm:$0xff]
      %v544 = vld [vmem:[#allocation3 + $0x40] sm:$0xff]
      %v545 = vld [vmem:[#allocation3 + $0x48] sm:$0xff]
      %v546 = vld [vmem:[#allocation3 + $0x50] sm:$0xff]
      %v547 = vld [vmem:[#allocation3 + $0x58] sm:$0xff]
      %v548 = vld [vmem:[#allocation3 + $0x60] sm:$0xff]
      %v549 = vld [vmem:[#allocation3 + $0x68] sm:$0xff]
      %v550 = vld [vmem:[#allocation3 + $0x70] sm:$0xff]
      %v551 = vld [vmem:[#allocation3 + $0x78] sm:$0xff]
      %552 = vmatprep.subr.mxu0 0.0
      %553 = vmatpush1.msra.mxu0 1.0
      %554 = vmatprep.subr.mxu0 0.0
      %555 = vmatpush1.msra.mxu0 0.0
      %556 = vmatprep.subr.mxu0 0.0
      %557 = vmatpush1.msra.mxu0 0.0
      %558 = vmatprep.subr.mxu0 0.0
      %559 = vmatpush1.msra.mxu0 0.0
      %560 = vmatprep.subr.mxu0 0.0
      %561 = vmatpush1.msra.mxu0 0.0
      %562 = vmatprep.subr.mxu0 0.0
      %563 = vmatpush1.msra.mxu0 0.0
      %564 = vmatprep.subr.mxu0 0.0
      %565 = vmatpush1.msra.mxu0 0.0
      %566 = vmatprep.subr.mxu0 0.0
      %567 = vmatpush1.msra.mxu0 0.0
      %568 = vmatprep.subr.mxu0 0.0
      %569 = vmatpush1.msra.mxu0 0.0
      %570 = vmatprep.subr.mxu0 0.0
      %571 = vmatpush1.msra.mxu0 0.0
      %572 = vmatprep.subr.mxu0 0.0
      %573 = vmatpush1.msra.mxu0 0.0
      %574 = vmatprep.subr.mxu0 0.0
      %575 = vmatpush1.msra.mxu0 0.0
      %576 = vmatprep.subr.mxu0 0.0
      %577 = vmatpush1.msra.mxu0 0.0
      %578 = vmatprep.subr.mxu0 0.0
      %579 = vmatpush1.msra.mxu0 0.0
      %580 = vmatprep.subr.mxu0 0.0
      %581 = vmatpush1.msra.mxu0 0.0
      %582 = vmatprep.subr.mxu0 0.0
      %583 = vmatpush1.msra.mxu0 0.0
      %584 = vmatprep.subr.mxu0 0.0
      %585 = vmatpush1.msra.mxu0 0.0
      %586 = vmatprep.subr.mxu0 0.0
      %587 = vmatpush1.msra.mxu0 0.0
      %588 = vmatprep.subr.mxu0 0.0
      %589 = vmatpush1.msra.mxu0 0.0
      %590 = vmatprep.subr.mxu0 0.0
      %591 = vmatpush1.msra.mxu0 0.0
      %592 = vmatprep.subr.mxu0 0.0
      %593 = vmatpush1.msra.mxu0 0.0
      %594 = vmatprep.subr.mxu0 0.0
      %595 = vmatpush1.msra.mxu0 0.0
      %596 = vmatprep.subr.mxu0 0.0
      %597 = vmatpush1.msra.mxu0 0.0
      %598 = vmatprep.subr.mxu0 0.0
      %599 = vmatpush1.msra.mxu0 0.0
      %600 = vmatprep.subr.mxu0 0.0
      %601 = vmatpush1.msra.mxu0 0.0
      %602 = vmatprep.subr.mxu0 0.0
      %603 = vmatpush1.msra.mxu0 0.0
      %604 = vmatprep.subr.mxu0 0.0
      %605 = vmatpush1.msra.mxu0 0.0
      %606 = vmatprep.subr.mxu0 0.0
      %607 = vmatpush1.msra.mxu0 0.0
      %608 = vmatprep.subr.mxu0 0.0
      %609 = vmatpush1.msra.mxu0 0.0
      %610 = vmatprep.subr.mxu0 0.0
      %611 = vmatpush1.msra.mxu0 0.0
      %612 = vmatprep.subr.mxu0 0.0
      %613 = vmatpush1.msra.mxu0 0.0
      %614 = vmatprep.subr.mxu0 0.0
      %615 = vmatpush1.msra.mxu0 0.0
      %616 = vmatprep.mubr.f32.mxu0 0.0
      %617 = vmatmul.mubr.f32.gmra.mrb[0].mxu0 %v312
      %v618 = vpop.f32.mrb[0].mxu0
      %v619 = vadd.f32 0.0, %v618
      %v620 = vpop.f32.mrb[0].mxu0
      %621 = vmatprep.mubr.f32.mxu0 0.0
      %622 = vmatmul.mubr.f32.gmra.mrb[0].mxu0 %v315
      %v623 = vpop.f32.mrb[0].mxu0
      %v624 = vadd.f32 0.0, %v623
      %v625 = vpop.f32.mrb[0].mxu0
      %626 = vmatprep.mubr.f32.mxu0 0.0
      %627 = vmatmul.mubr.f32.gmra.mrb[0].mxu0 %v318
      %v628 = vpop.f32.mrb[0].mxu0
      %v629 = vadd.f32 0.0, %v628
      %v630 = vpop.f32.mrb[0].mxu0
      %631 = vmatprep.mubr.f32.mxu0 0.0
      %632 = vmatmul.mubr.f32.gmra.mrb[0].mxu0 %v321
      %v633 = vpop.f32.mrb[0].mxu0
      %v634 = vadd.f32 0.0, %v633
      %v635 = vpop.f32.mrb[0].mxu0
      %636 = vmatprep.mubr.f32.mxu0 0.0
      %637 = vmatmul.mubr.f32.gmra.mrb[0].mxu0 %v324
      %v638 = vpop.f32.mrb[0].mxu0
      %v639 = vadd.f32 0.0, %v638
      %v640 = vpop.f32.mrb[0].mxu0
      %641 = vmatprep.mubr.f32.mxu0 0.0
      %642 = vmatmul.mubr.f32.gmra.mrb[0].mxu0 %v327
      %v643 = vpop.f32.mrb[0].mxu0
      %v644 = vadd.f32 0.0, %v643
      %v645 = vpop.f32.mrb[0].mxu0
      %646 = vmatprep.mubr.f32.mxu0 0.0
      %647 = vmatmul.mubr.f32.gmra.mrb[0].mxu0 %v330
      %v648 = vpop.f32.mrb[0].mxu0
      %v649 = vadd.f32 0.0, %v648
      %v650 = vpop.f32.mrb[0].mxu0
      %651 = vmatprep.mubr.f32.mxu0 0.0
      %652 = vmatmul.mubr.f32.gmra.mrb[0].mxu0 %v333
      %v653 = vpop.f32.mrb[0].mxu0
      %v654 = vadd.f32 0.0, %v653
      %v655 = vpop.f32.mrb[0].mxu0
      %656 = vmatprep.mubr.f32.mxu0 0.0
      %657 = vmatmul.mubr.f32.gmra.mrb[0].mxu0 %v336
      %v658 = vpop.f32.mrb[0].mxu0
      %v659 = vadd.f32 0.0, %v658
      %v660 = vpop.f32.mrb[0].mxu0
      %661 = vmatprep.mubr.f32.mxu0 0.0
      %662 = vmatmul.mubr.f32.gmra.mrb[0].mxu0 %v339
      %v663 = vpop.f32.mrb[0].mxu0
      %v664 = vadd.f32 0.0, %v663
      %v665 = vpop.f32.mrb[0].mxu0
      %666 = vmatprep.mubr.f32.mxu0 0.0
      %667 = vmatmul.mubr.f32.gmra.mrb[0].mxu0 %v342
      %v668 = vpop.f32.mrb[0].mxu0
      %v669 = vadd.f32 0.0, %v668
      %v670 = vpop.f32.mrb[0].mxu0
      %671 = vmatprep.mubr.f32.mxu0 0.0
      %672 = vmatmul.mubr.f32.gmra.mrb[0].mxu0 %v345
      %v673 = vpop.f32.mrb[0].mxu0
      %v674 = vadd.f32 0.0, %v673
      %v675 = vpop.f32.mrb[0].mxu0
      %676 = vmatprep.mubr.f32.mxu0 0.0
      %677 = vmatmul.mubr.f32.gmra.mrb[0].mxu0 %v348
      %v678 = vpop.f32.mrb[0].mxu0
      %v679 = vadd.f32 0.0, %v678
      %v680 = vpop.f32.mrb[0].mxu0
      %681 = vmatprep.mubr.f32.mxu0 0.0
      %682 = vmatmul.mubr.f32.gmra.mrb[0].mxu0 %v351
      %v683 = vpop.f32.mrb[0].mxu0
      %v684 = vadd.f32 0.0, %v683
      %v685 = vpop.f32.mrb[0].mxu0
      %686 = vmatprep.mubr.f32.mxu0 0.0
      %687 = vmatmul.mubr.f32.gmra.mrb[0].mxu0 %v354
      %v688 = vpop.f32.mrb[0].mxu0
      %v689 = vadd.f32 0.0, %v688
      %v690 = vpop.f32.mrb[0].mxu0
      %691 = vmatprep.mubr.f32.mxu0 0.0
      %692 = vmatmul.mubr.f32.gmra.mrb[0].mxu0 %v357
      %v693 = vpop.f32.mrb[0].mxu0
      %v694 = vadd.f32 0.0, %v693
      %v695 = vpop.f32.mrb[0].mxu0
      %696 = vdwg.mxu0
      %v697 = vadd.f32 %v536, %v619
      %v698 = vadd.f32 %v537, %v624
      %v699 = vadd.f32 %v538, %v629
      %v700 = vadd.f32 %v539, %v634
      %v701 = vadd.f32 %v540, %v639
      %v702 = vadd.f32 %v541, %v644
      %v703 = vadd.f32 %v542, %v649
      %v704 = vadd.f32 %v543, %v654
      %v705 = vadd.f32 %v544, %v659
      %v706 = vadd.f32 %v545, %v664
      %v707 = vadd.f32 %v546, %v669
      %v708 = vadd.f32 %v547, %v674
      %v709 = vadd.f32 %v548, %v679
      %v710 = vadd.f32 %v549, %v684
      %v711 = vadd.f32 %v550, %v689
      %v712 = vadd.f32 %v551, %v694
      %713 = vst [vmem:[#allocation3] sm:$0xff] %v697
      %714 = vst [vmem:[#allocation3 + $0x8] sm:$0xff] %v698
      %715 = vst [vmem:[#allocation3 + $0x10] sm:$0xff] %v699
      %716 = vst [vmem:[#allocation3 + $0x18] sm:$0xff] %v700
      %717 = vst [vmem:[#allocation3 + $0x20] sm:$0xff] %v701
      %718 = vst [vmem:[#allocation3 + $0x28] sm:$0xff] %v702
      %719 = vst [vmem:[#allocation3 + $0x30] sm:$0xff] %v703
      %720 = vst [vmem:[#allocation3 + $0x38] sm:$0xff] %v704
      %721 = vst [vmem:[#allocation3 + $0x40] sm:$0xff] %v705
      %722 = vst [vmem:[#allocation3 + $0x48] sm:$0xff] %v706
      %723 = vst [vmem:[#allocation3 + $0x50] sm:$0xff] %v707
      %724 = vst [vmem:[#allocation3 + $0x58] sm:$0xff] %v708
      %725 = vst [vmem:[#allocation3 + $0x60] sm:$0xff] %v709
      %726 = vst [vmem:[#allocation3 + $0x68] sm:$0xff] %v710
      %727 = vst [vmem:[#allocation3 + $0x70] sm:$0xff] %v711
      %728 = vst [vmem:[#allocation3 + $0x78] sm:$0xff] %v712
      // Predicated region
      $region37: #{linear_attention.2} parent=31 // pred_check
        %p729 = pneg %p219
      $region38: #{linear_attention.2} parent=31 // pred_check_branch
        %731 = sbr.rel (%p729) target = $region40
      $region39: #{linear_attention.2} parent=31 // pred_region
        %v732 = vld [vmem:[%s0] sm:$0xff]
        %v733 = vld [vmem:[%s0 + $0x8] sm:$0xff]
        %v734 = vld [vmem:[%s0 + $0x10] sm:$0xff]
        %v735 = vld [vmem:[%s0 + $0x18] sm:$0xff]
        %v736 = vld [vmem:[%s0 + $0x20] sm:$0xff]
        %v737 = vld [vmem:[%s0 + $0x28] sm:$0xff]
        %v738 = vld [vmem:[%s0 + $0x30] sm:$0xff]
        %v739 = vld [vmem:[%s0 + $0x38] sm:$0xff]
        %v740 = vld [vmem:[%s0 + $0x40] sm:$0xff]
        %v741 = vld [vmem:[%s0 + $0x48] sm:$0xff]
        %v742 = vld [vmem:[%s0 + $0x50] sm:$0xff]
        %v743 = vld [vmem:[%s0 + $0x58] sm:$0xff]
        %v744 = vld [vmem:[%s0 + $0x60] sm:$0xff]
        %v745 = vld [vmem:[%s0 + $0x68] sm:$0xff]
        %v746 = vld [vmem:[%s0 + $0x70] sm:$0xff]
        %v747 = vld [vmem:[%s0 + $0x78] sm:$0xff]
        %v748 = vld [vmem:[#allocation3] sm:$0xff]
        %v749 = vld [vmem:[#allocation3 + $0x8] sm:$0xff]
        %v750 = vld [vmem:[#allocation3 + $0x10] sm:$0xff]
        %v751 = vld [vmem:[#allocation3 + $0x18] sm:$0xff]
        %v752 = vld [vmem:[#allocation3 + $0x20] sm:$0xff]
        %v753 = vld [vmem:[#allocation3 + $0x28] sm:$0xff]
        %v754 = vld [vmem:[#allocation3 + $0x30] sm:$0xff]
        %v755 = vld [vmem:[#allocation3 + $0x38] sm:$0xff]
        %v756 = vld [vmem:[#allocation3 + $0x40] sm:$0xff]
        %v757 = vld [vmem:[#allocation3 + $0x48] sm:$0xff]
        %v758 = vld [vmem:[#allocation3 + $0x50] sm:$0xff]
        %v759 = vld [vmem:[#allocation3 + $0x58] sm:$0xff]
        %v760 = vld [vmem:[#allocation3 + $0x60] sm:$0xff]
        %v761 = vld [vmem:[#allocation3 + $0x68] sm:$0xff]
        %v762 = vld [vmem:[#allocation3 + $0x70] sm:$0xff]
        %v763 = vld [vmem:[#allocation3 + $0x78] sm:$0xff]
        %764 = vmax.xlane.f32.xlu0 %v748
        %v765 = vpop.xlane.xlu0 %764
        %766 = vmax.xlane.f32.xlu0 %v749
        %v767 = vpop.xlane.xlu0 %766
        %768 = vmax.xlane.f32.xlu0 %v750
        %v769 = vpop.xlane.xlu0 %768
        %770 = vmax.xlane.f32.xlu0 %v751
        %v771 = vpop.xlane.xlu0 %770
        %772 = vmax.xlane.f32.xlu0 %v752
        %v773 = vpop.xlane.xlu0 %772
        %774 = vmax.xlane.f32.xlu0 %v753
        %v775 = vpop.xlane.xlu0 %774
        %776 = vmax.xlane.f32.xlu0 %v754
        %v777 = vpop.xlane.xlu0 %776
        %778 = vmax.xlane.f32.xlu0 %v755
        %v779 = vpop.xlane.xlu0 %778
        %780 = vmax.xlane.f32.xlu0 %v756
        %v781 = vpop.xlane.xlu0 %780
        %782 = vmax.xlane.f32.xlu0 %v757
        %v783 = vpop.xlane.xlu0 %782
        %784 = vmax.xlane.f32.xlu0 %v758
        %v785 = vpop.xlane.xlu0 %784
        %786 = vmax.xlane.f32.xlu0 %v759
        %v787 = vpop.xlane.xlu0 %786
        %788 = vmax.xlane.f32.xlu0 %v760
        %v789 = vpop.xlane.xlu0 %788
        %790 = vmax.xlane.f32.xlu0 %v761
        %v791 = vpop.xlane.xlu0 %790
        %792 = vmax.xlane.f32.xlu0 %v762
        %v793 = vpop.xlane.xlu0 %792
        %794 = vmax.xlane.f32.xlu0 %v763
        %v795 = vpop.xlane.xlu0 %794
        %v796 = vld [vmem:[#allocation2] sm:$0xff]
        %v797 = vld [vmem:[#allocation2 + $0x8] sm:$0xff]
        %v798 = vld [vmem:[#allocation2 + $0x10] sm:$0xff]
        %v799 = vld [vmem:[#allocation2 + $0x18] sm:$0xff]
        %v800 = vld [vmem:[#allocation2 + $0x20] sm:$0xff]
        %v801 = vld [vmem:[#allocation2 + $0x28] sm:$0xff]
        %v802 = vld [vmem:[#allocation2 + $0x30] sm:$0xff]
        %v803 = vld [vmem:[#allocation2 + $0x38] sm:$0xff]
        %v804 = vld [vmem:[#allocation2 + $0x40] sm:$0xff]
        %v805 = vld [vmem:[#allocation2 + $0x48] sm:$0xff]
        %v806 = vld [vmem:[#allocation2 + $0x50] sm:$0xff]
        %v807 = vld [vmem:[#allocation2 + $0x58] sm:$0xff]
        %v808 = vld [vmem:[#allocation2 + $0x60] sm:$0xff]
        %v809 = vld [vmem:[#allocation2 + $0x68] sm:$0xff]
        %v810 = vld [vmem:[#allocation2 + $0x70] sm:$0xff]
        %v811 = vld [vmem:[#allocation2 + $0x78] sm:$0xff]
        %v812 = vmul.f32 %v796, %v732
        %v813 = vmul.f32 %v797, %v733
        %v814 = vmul.f32 %v798, %v734
        %v815 = vmul.f32 %v799, %v735
        %v816 = vmul.f32 %v800, %v736
        %v817 = vmul.f32 %v801, %v737
        %v818 = vmul.f32 %v802, %v738
        %v819 = vmul.f32 %v803, %v739
        %v820 = vmul.f32 %v804, %v740
        %v821 = vmul.f32 %v805, %v741
        %v822 = vmul.f32 %v806, %v742
        %v823 = vmul.f32 %v807, %v743
        %v824 = vmul.f32 %v808, %v744
        %v825 = vmul.f32 %v809, %v745
        %v826 = vmul.f32 %v810, %v746
        %v827 = vmul.f32 %v811, %v747
        %828 = vst [vmem:[%s218] sm:$0xff] %v812
        %829 = vst [vmem:[%s218 + $0x10] sm:$0xff] %v813
        %830 = vst [vmem:[%s218 + $0x20] sm:$0xff] %v814
        %831 = vst [vmem:[%s218 + $0x30] sm:$0xff] %v815
        %832 = vst [vmem:[%s218 + $0x40] sm:$0xff] %v816
        %833 = vst [vmem:[%s218 + $0x50] sm:$0xff] %v817
        %834 = vst [vmem:[%s218 + $0x60] sm:$0xff] %v818
        %835 = vst [vmem:[%s218 + $0x70] sm:$0xff] %v819
        %836 = vst [vmem:[%s218 + $0x80] sm:$0xff] %v820
        %837 = vst [vmem:[%s218 + $0x90] sm:$0xff] %v821
        %838 = vst [vmem:[%s218 + $0xa0] sm:$0xff] %v822
        %839 = vst [vmem:[%s218 + $0xb0] sm:$0xff] %v823
        %840 = vst [vmem:[%s218 + $0xc0] sm:$0xff] %v824
        %841 = vst [vmem:[%s218 + $0xd0] sm:$0xff] %v825
        %842 = vst [vmem:[%s218 + $0xe0] sm:$0xff] %v826
        %843 = vst [vmem:[%s218 + $0xf0] sm:$0xff] %v827
        %v844 = vmul.f32 %v765, %v732
        %v845 = vmul.f32 %v767, %v733
        %v846 = vmul.f32 %v769, %v734
        %v847 = vmul.f32 %v771, %v735
        %v848 = vmul.f32 %v773, %v736
        %v849 = vmul.f32 %v775, %v737
        %v850 = vmul.f32 %v777, %v738
        %v851 = vmul.f32 %v779, %v739
        %v852 = vmul.f32 %v781, %v740
        %v853 = vmul.f32 %v783, %v741
        %v854 = vmul.f32 %v785, %v742
        %v855 = vmul.f32 %v787, %v743
        %v856 = vmul.f32 %v789, %v744
        %v857 = vmul.f32 %v791, %v745
        %v858 = vmul.f32 %v793, %v746
        %v859 = vmul.f32 %v795, %v747
        %860 = vst [vmem:[%s218 + $0x8] sm:$0xff] %v844
        %861 = vst [vmem:[%s218 + $0x18] sm:$0xff] %v845
        %862 = vst [vmem:[%s218 + $0x28] sm:$0xff] %v846
        %863 = vst [vmem:[%s218 + $0x38] sm:$0xff] %v847
        %864 = vst [vmem:[%s218 + $0x48] sm:$0xff] %v848
        %865 = vst [vmem:[%s218 + $0x58] sm:$0xff] %v849
        %866 = vst [vmem:[%s218 + $0x68] sm:$0xff] %v850
        %867 = vst [vmem:[%s218 + $0x78] sm:$0xff] %v851
        %868 = vst [vmem:[%s218 + $0x88] sm:$0xff] %v852
        %869 = vst [vmem:[%s218 + $0x98] sm:$0xff] %v853
        %870 = vst [vmem:[%s218 + $0xa8] sm:$0xff] %v854
        %871 = vst [vmem:[%s218 + $0xb8] sm:$0xff] %v855
        %872 = vst [vmem:[%s218 + $0xc8] sm:$0xff] %v856
        %873 = vst [vmem:[%s218 + $0xd8] sm:$0xff] %v857
        %874 = vst [vmem:[%s218 + $0xe8] sm:$0xff] %v858
        %875 = vst [vmem:[%s218 + $0xf8] sm:$0xff] %v859
      $region40: #{linear_attention.2} parent=31 // pred_fallthru
        _
      %p876 = scmp.lt.s32.totalorder %s18, 1
      %s877 = scalar_select %p876, %s18, 1
      %s878 = smul.addr %s877, 32
      %s879 = smul.addr %s878, 8
      %s880 = scalar_lea.vmem %s3, %s879
      // Predicated region
      $region41: #{linear_attention.2} parent=31 // pred_check
        %p881 = pneg %p121
      $region42: #{linear_attention.2} parent=31 // pred_check_branch
        %883 = sbr.rel (%p881) target = $region44
      $region43: #{linear_attention.2} parent=31 // pred_region
        _
      $region44: #{linear_attention.2} parent=31 // pred_fallthru
        _
    $region32: #{linear_attention.2} parent=5 // pred_fallthru
      _
    %p884 = scmp.le.s32.totalorder 2, %s9
    // Predicated region
    $region45: #{linear_attention.2} parent=5 // pred_check
      %p885 = pneg %p884
    $region46: #{linear_attention.2} parent=5 // pred_check_branch
      %887 = sbr.rel (%p885) target = $region48
    $region47: #{linear_attention.2} parent=5 // pred_region
      %s888 = ssub.s32 %s9, 2
      // Predicated region
      $region49: #{linear_attention.2} parent=47 // pred_check
        %p889 = pneg %p127
      $region50: #{linear_attention.2} parent=47 // pred_check_branch
        %891 = sbr.rel (%p889) target = $region52
      $region51: #{linear_attention.2} parent=47 // pred_region
        %p892 = scmp.lt.s32.totalorder %s20, 1
        %s893 = scalar_select %p892, %s20, 1
        %s894 = smul.addr %s893, 32
        %s895 = smul.addr %s894, 8
        %s896 = scalar_lea.vmem %s3, %s895
      $region52: #{linear_attention.2} parent=47 // pred_fallthru
        _
    $region48: #{linear_attention.2} parent=5 // pred_fallthru
      _
  $region6: #{linear_attention.2} parent=0 // loop_footer
    %s13 = sadd.s32 1, %s9
  $region7: #{linear_attention.2} parent=0 // loop_footer_branch
    %8 = sbr.rel target = $region3
  $region8: #{linear_attention.2} parent=0 // loop_exit
    _

</llo_original>
